<compile_context>
chip_gen: v5e
topology: v5e:2x2
jax: 0.10.0
libtpu: 0.0.40
codegen_flags: <defaults>
</compile_context>

<pallas_src>
import functools

import jax
import jax.numpy as jnp
from jax.experimental import pallas as pl
from jax.experimental.pallas import tpu as pltpu

C_IN = 32
C_OUT = 176
BN_EPS = 1e-5


def bottleneck_kernel(x_ref, w_ref, gamma_ref, beta_ref, o_ref,
                      sum_ref, sumsq_ref, scale_ref, shift_ref, *, m_total):
    # x_ref:      (1, C_IN, tile_hw)  one image's HW tile (channels on sublanes)
    # w_ref:      (C_OUT, C_IN)
    # gamma/beta: (C_OUT, 1)
    # o_ref:      (1, C_OUT, tile_hw)
    # scratch:    four (C_OUT, 1) f32 VMEM buffers (sum, sumsq, folded scale, folded shift)
    phase = pl.program_id(0)
    first_tile = jnp.logical_and(pl.program_id(1) == 0, pl.program_id(2) == 0)

    # 1x1 conv == (C_OUT, C_IN) @ (C_IN, tile_hw) on the MXU; K=32, so it is far cheaper
    # to recompute in phase 1 than to round-trip y through HBM.
    y = jnp.dot(w_ref[...], x_ref[0], preferred_element_type=jnp.float32)  # (C_OUT, tile_hw)

    @pl.when(jnp.logical_and(phase == 0, first_tile))
    def _init_stats():
        sum_ref[...] = jnp.zeros_like(sum_ref)
        sumsq_ref[...] = jnp.zeros_like(sumsq_ref)

    @pl.when(phase == 0)
    def _accumulate_stats():
        # Single pass over y: per-channel sum and sum-of-squares (lane reduction -> XLU).
        sum_ref[...] += jnp.sum(y, axis=1, keepdims=True)
        sumsq_ref[...] += jnp.sum(y * y, axis=1, keepdims=True)

    @pl.when(jnp.logical_and(phase == 1, first_tile))
    def _finalize_stats():
        inv_m = 1.0 / m_total
        mean = sum_ref[...] * inv_m                                     # (C_OUT, 1)
        var = jnp.maximum(sumsq_ref[...] * inv_m - mean * mean, 0.0)     # guard cancellation
        inv_std = jax.lax.rsqrt(var + BN_EPS)
        scale = gamma_ref[...] * inv_std
        scale_ref[...] = scale
        shift_ref[...] = beta_ref[...] - mean * scale

    @pl.when(phase == 1)
    def _apply():
        # BN folded into per-channel scale/shift: one mul + add + max per element.
        o_ref[0] = jnp.maximum(y * scale_ref[...] + shift_ref[...], 0.0).astype(o_ref.dtype)


def _pick_tile_hw(hw):
    # Largest lane-friendly tile that divides HW; fall back to full extent (small inputs).
    for cand in (2048, 1024, 512, 256, 128):
        if hw % cand == 0:
            return cand
    return hw


def bottleneck_forward(x_nchw, w_conv1, gamma, beta):
    """x_nchw: (N, 32, H, W) f32.  w_conv1: (C_OUT, C_IN, 1, 1).  gamma/beta: (C_OUT,)."""
    n, c, h, w = x_nchw.shape
    assert c == C_IN
    hw = h * w
    m_total = n * hw

    # Free reshapes only -- no NCHW<->NHWC transposes around the kernel.
    x3 = x_nchw.reshape(n, C_IN, hw)
    w_mat = w_conv1.reshape(C_OUT, C_IN)
    gamma2 = gamma.reshape(C_OUT, 1)
    beta2 = beta.reshape(C_OUT, 1)

    tile_hw = _pick_tile_hw(hw)
    t_tiles = hw // tile_hw
    grid = (2, n, t_tiles)   # (phase, image, hw-tile)

    out3 = pl.pallas_call(
        functools.partial(bottleneck_kernel, m_total=float(m_total)),
        out_shape=jax.ShapeDtypeStruct((n, C_OUT, hw), jnp.float32),
        grid=grid,
        in_specs=[
            pl.BlockSpec((1, C_IN, tile_hw), lambda p, i, t: (i, 0, t)),
            pl.BlockSpec((C_OUT, C_IN), lambda p, i, t: (0, 0)),
            pl.BlockSpec((C_OUT, 1), lambda p, i, t: (0, 0)),
            pl.BlockSpec((C_OUT, 1), lambda p, i, t: (0, 0)),
        ],
        # Pin the out block to (0,0,0) during phase 0 (it is never written there), so no
        # spurious HBM writeback happens; phase 1 then visits each block exactly once.
        out_specs=pl.BlockSpec((1, C_OUT, tile_hw), lambda p, i, t: (i * p, 0, t * p)),
        scratch_shapes=[
            pltpu.VMEM((C_OUT, 1), jnp.float32),  # sum(y)
            pltpu.VMEM((C_OUT, 1), jnp.float32),  # sum(y*y)
            pltpu.VMEM((C_OUT, 1), jnp.float32),  # folded scale
            pltpu.VMEM((C_OUT, 1), jnp.float32),  # folded shift
        ],
        # All axes "arbitrary": the stats accumulate sequentially into one scratch buffer.
        # (A v7x megacore split of the apply phase would need per-core partial stats plus a
        #  combine step; intentionally left out to keep single-scratch correctness.)
        compiler_params=pltpu.CompilerParams(
            dimension_semantics=("arbitrary", "arbitrary", "arbitrary"),
        ),
    )(x3, w_mat, gamma2, beta2)

    return out3.reshape(n, C_OUT, h, w)


def _reference(x_nchw, w_conv1, gamma, beta):
    # Pure-JAX two-pass reference for sanity checking.
    y = jnp.einsum('nchw,oc->nohw', x_nchw, w_conv1.reshape(C_OUT, C_IN))
    mean = jnp.mean(y, axis=(0, 2, 3), keepdims=True)
    var = jnp.mean((y - mean) ** 2, axis=(0, 2, 3), keepdims=True)
    out = (y - mean) / jnp.sqrt(var + BN_EPS) * gamma[None, :, None, None] \
        + beta[None, :, None, None]
    return jnp.maximum(out, 0.0)


if __name__ == "__main__":
    key = jax.random.PRNGKey(0)
    k_x, k_w, k_g, k_b = jax.random.split(key, 4)

    # Small shapes consistent with the module: batch=2, in-channels=32, spatial=8x8.
    x = jax.random.normal(k_x, (2, C_IN, 8, 8), dtype=jnp.float32)
    w_conv1 = jax.random.normal(k_w, (C_OUT, C_IN, 1, 1), dtype=jnp.float32) * 0.1
    gamma = 1.0 + 0.1 * jax.random.normal(k_g, (C_OUT,), dtype=jnp.float32)
    beta = 0.1 * jax.random.normal(k_b, (C_OUT,), dtype=jnp.float32)

    out = bottleneck_forward(x, w_conv1, gamma, beta)
    jax.block_until_ready(out)

    ref = _reference(x, w_conv1, gamma, beta)
    assert out.shape == (2, C_OUT, 8, 8), out.shape
    assert jnp.allclose(out, ref, atol=1e-3, rtol=1e-3), float(jnp.max(jnp.abs(out - ref)))

    print("KERNEL_OK")
</pallas_src>

<mosaic_0001>
module attributes {stable_mosaic.version = 11 : i64} {
  func.func @bottleneck_kernel(%arg0: i32, %arg1: i32, %arg2: i32, %arg3: memref<1x32x64xf32, #tpu.memory_space<vmem>>, %arg4: memref<176x32xf32, #tpu.memory_space<vmem>>, %arg5: memref<176x1xf32, #tpu.memory_space<vmem>>, %arg6: memref<176x1xf32, #tpu.memory_space<vmem>>, %arg7: memref<1x176x64xf32, #tpu.memory_space<vmem>>, %arg8: memref<176x1xf32, #tpu.memory_space<vmem>>, %arg9: memref<176x1xf32, #tpu.memory_space<vmem>>, %arg10: memref<176x1xf32, #tpu.memory_space<vmem>>, %arg11: memref<176x1xf32, #tpu.memory_space<vmem>>) attributes {dimension_semantics = [#tpu.dimension_semantics<arbitrary>, #tpu.dimension_semantics<arbitrary>, #tpu.dimension_semantics<arbitrary>], iteration_bounds = array<i64: 2, 2, 1>, scalar_prefetch = 0 : i64, scratch_operands = 4 : i64, tpu.core_type = #tpu.core_type<tc>, window_params = [{transform_indices = @transform_0, window_bounds = array<i64: 1, 32, 64>}, {pipeline_mode = #tpu.pipeline_mode<synchronous>, transform_indices = @transform_1, window_bounds = array<i64: 176, 32>}, {pipeline_mode = #tpu.pipeline_mode<synchronous>, transform_indices = @transform_2, window_bounds = array<i64: 176, 1>}, {pipeline_mode = #tpu.pipeline_mode<synchronous>, transform_indices = @transform_3, window_bounds = array<i64: 176, 1>}, {transform_indices = @transform_4, window_bounds = array<i64: 1, 176, 64>}]} {
    %c0_i32 = arith.constant 0 : i32
    %0 = arith.cmpi eq, %arg1, %c0_i32 : i32
    %c0_i32_0 = arith.constant 0 : i32
    %1 = arith.cmpi eq, %arg2, %c0_i32_0 : i32
    %2 = arith.andi %0, %1 : i1
    %c0 = arith.constant 0 : index
    %c0_1 = arith.constant 0 : index
    %3 = vector.load %arg4[%c0, %c0_1] : memref<176x32xf32, #tpu.memory_space<vmem>>, vector<176x32xf32>
    %c0_2 = arith.constant 0 : index
    %c0_3 = arith.constant 0 : index
    %c0_4 = arith.constant 0 : index
    %4 = vector.load %arg3[%c0_2, %c0_3, %c0_4] : memref<1x32x64xf32, #tpu.memory_space<vmem>>, vector<1x32x64xf32>
    %5 = vector.shape_cast %4 : vector<1x32x64xf32> to vector<32x64xf32>
    %cst = arith.constant dense<0.000000e+00> : vector<176x64xf32>
    %6 = tpu.matmul %3, %5, %cst {dimension_numbers = #tpu.dot_dimension_numbers<[1], [0], [0], [1], [0, 0, 1, 1], [], []>} : vector<176x32xf32>, vector<32x64xf32>, vector<176x64xf32> -> vector<176x64xf32>
    %c0_i32_5 = arith.constant 0 : i32
    %7 = arith.cmpi eq, %arg0, %c0_i32_5 : i32
    %8 = arith.andi %7, %2 : i1
    %9 = arith.extui %8 : i1 to i32
    %c0_i32_6 = arith.constant 0 : i32
    %10 = arith.cmpi ne, %9, %c0_i32_6 : i32
    scf.if %10 {
      %cst_12 = arith.constant 0.000000e+00 : f32
      %21 = vector.broadcast %cst_12 : f32 to vector<176x1xf32>
      %c0_13 = arith.constant 0 : index
      %c0_14 = arith.constant 0 : index
      %22 = vector.load %arg8[%c0_13, %c0_14] : memref<176x1xf32, #tpu.memory_space<vmem>>, vector<176x1xf32>
      tpu.vector_store %arg8[%c0_13, %c0_14], %21 {strides = array<i32>} : memref<176x1xf32, #tpu.memory_space<vmem>>, vector<176x1xf32>,
      %cst_15 = arith.constant 0.000000e+00 : f32
      %23 = vector.broadcast %cst_15 : f32 to vector<176x1xf32>
      %c0_16 = arith.constant 0 : index
      %c0_17 = arith.constant 0 : index
      %24 = vector.load %arg9[%c0_16, %c0_17] : memref<176x1xf32, #tpu.memory_space<vmem>>, vector<176x1xf32>
      tpu.vector_store %arg9[%c0_16, %c0_17], %23 {strides = array<i32>} : memref<176x1xf32, #tpu.memory_space<vmem>>, vector<176x1xf32>,
    } else {
    }
    %c0_i32_7 = arith.constant 0 : i32
    %11 = arith.cmpi eq, %arg0, %c0_i32_7 : i32
    %12 = arith.extui %11 : i1 to i32
    %c0_i32_8 = arith.constant 0 : i32
    %13 = arith.cmpi ne, %12, %c0_i32_8 : i32
    scf.if %13 {
      %c0_12 = arith.constant 0 : index
      %c0_13 = arith.constant 0 : index
      %21 = vector.load %arg8[%c0_12, %c0_13] : memref<176x1xf32, #tpu.memory_space<vmem>>, vector<176x1xf32>
      %cst_14 = arith.constant dense<0.000000e+00> : vector<176xf32>
      %22 = vector.multi_reduction <add>, %6, %cst_14 [1] : vector<176x64xf32> to vector<176xf32>
      %23 = vector.shape_cast %22 : vector<176xf32> to vector<176x1xf32>
      %24 = arith.addf %21, %23 : vector<176x1xf32>
      %c0_15 = arith.constant 0 : index
      %c0_16 = arith.constant 0 : index
      %25 = vector.load %arg8[%c0_15, %c0_16] : memref<176x1xf32, #tpu.memory_space<vmem>>, vector<176x1xf32>
      tpu.vector_store %arg8[%c0_15, %c0_16], %24 {strides = array<i32>} : memref<176x1xf32, #tpu.memory_space<vmem>>, vector<176x1xf32>,
      %c0_17 = arith.constant 0 : index
      %c0_18 = arith.constant 0 : index
      %26 = vector.load %arg9[%c0_17, %c0_18] : memref<176x1xf32, #tpu.memory_space<vmem>>, vector<176x1xf32>
      %27 = arith.mulf %6, %6 : vector<176x64xf32>
      %cst_19 = arith.constant dense<0.000000e+00> : vector<176xf32>
      %28 = vector.multi_reduction <add>, %27, %cst_19 [1] : vector<176x64xf32> to vector<176xf32>
      %29 = vector.shape_cast %28 : vector<176xf32> to vector<176x1xf32>
      %30 = arith.addf %26, %29 : vector<176x1xf32>
      %c0_20 = arith.constant 0 : index
      %c0_21 = arith.constant 0 : index
      %31 = vector.load %arg9[%c0_20, %c0_21] : memref<176x1xf32, #tpu.memory_space<vmem>>, vector<176x1xf32>
      tpu.vector_store %arg9[%c0_20, %c0_21], %30 {strides = array<i32>} : memref<176x1xf32, #tpu.memory_space<vmem>>, vector<176x1xf32>,
    } else {
    }
    %c1_i32 = arith.constant 1 : i32
    %14 = arith.cmpi eq, %arg0, %c1_i32 : i32
    %15 = arith.andi %14, %2 : i1
    %16 = arith.extui %15 : i1 to i32
    %c0_i32_9 = arith.constant 0 : i32
    %17 = arith.cmpi ne, %16, %c0_i32_9 : i32
    scf.if %17 {
      %c0_12 = arith.constant 0 : index
      %c0_13 = arith.constant 0 : index
      %21 = vector.load %arg8[%c0_12, %c0_13] : memref<176x1xf32, #tpu.memory_space<vmem>>, vector<176x1xf32>
      %cst_14 = arith.constant 7.812500e-03 : f32
      %22 = vector.broadcast %cst_14 : f32 to vector<176x1xf32>
      %23 = arith.mulf %21, %22 : vector<176x1xf32>
      %c0_15 = arith.constant 0 : index
      %c0_16 = arith.constant 0 : index
      %24 = vector.load %arg9[%c0_15, %c0_16] : memref<176x1xf32, #tpu.memory_space<vmem>>, vector<176x1xf32>
      %cst_17 = arith.constant 7.812500e-03 : f32
      %25 = vector.broadcast %cst_17 : f32 to vector<176x1xf32>
      %26 = arith.mulf %24, %25 : vector<176x1xf32>
      %27 = arith.mulf %23, %23 : vector<176x1xf32>
      %28 = arith.subf %26, %27 : vector<176x1xf32>
      %cst_18 = arith.constant 0.000000e+00 : f32
      %29 = vector.broadcast %cst_18 : f32 to vector<176x1xf32>
      %30 = arith.maximumf %28, %29 : vector<176x1xf32>
      %cst_19 = arith.constant 9.99999974E-6 : f32
      %31 = vector.broadcast %cst_19 : f32 to vector<176x1xf32>
      %32 = arith.addf %30, %31 : vector<176x1xf32>
      %33 = math.rsqrt %32 : vector<176x1xf32>
      %c0_20 = arith.constant 0 : index
      %c0_21 = arith.constant 0 : index
      %34 = vector.load %arg5[%c0_20, %c0_21] : memref<176x1xf32, #tpu.memory_space<vmem>>, vector<176x1xf32>
      %35 = arith.mulf %34, %33 : vector<176x1xf32>
      %c0_22 = arith.constant 0 : index
      %c0_23 = arith.constant 0 : index
      %36 = vector.load %arg10[%c0_22, %c0_23] : memref<176x1xf32, #tpu.memory_space<vmem>>, vector<176x1xf32>
      tpu.vector_store %arg10[%c0_22, %c0_23], %35 {strides = array<i32>} : memref<176x1xf32, #tpu.memory_space<vmem>>, vector<176x1xf32>,
      %c0_24 = arith.constant 0 : index
      %c0_25 = arith.constant 0 : index
      %37 = vector.load %arg6[%c0_24, %c0_25] : memref<176x1xf32, #tpu.memory_space<vmem>>, vector<176x1xf32>
      %38 = arith.mulf %23, %35 : vector<176x1xf32>
      %39 = arith.subf %37, %38 : vector<176x1xf32>
      %c0_26 = arith.constant 0 : index
      %c0_27 = arith.constant 0 : index
      %40 = vector.load %arg11[%c0_26, %c0_27] : memref<176x1xf32, #tpu.memory_space<vmem>>, vector<176x1xf32>
      tpu.vector_store %arg11[%c0_26, %c0_27], %39 {strides = array<i32>} : memref<176x1xf32, #tpu.memory_space<vmem>>, vector<176x1xf32>,
    } else {
    }
    %c1_i32_10 = arith.constant 1 : i32
    %18 = arith.cmpi eq, %arg0, %c1_i32_10 : i32
    %19 = arith.extui %18 : i1 to i32
    %c0_i32_11 = arith.constant 0 : i32
    %20 = arith.cmpi ne, %19, %c0_i32_11 : i32
    scf.if %20 {
      %c0_12 = arith.constant 0 : index
      %c0_13 = arith.constant 0 : index
      %21 = vector.load %arg10[%c0_12, %c0_13] : memref<176x1xf32, #tpu.memory_space<vmem>>, vector<176x1xf32>
      %22 = vector.broadcast %21 : vector<176x1xf32> to vector<176x64xf32>
      %23 = arith.mulf %6, %22 : vector<176x64xf32>
      %c0_14 = arith.constant 0 : index
      %c0_15 = arith.constant 0 : index
      %24 = vector.load %arg11[%c0_14, %c0_15] : memref<176x1xf32, #tpu.memory_space<vmem>>, vector<176x1xf32>
      %25 = vector.broadcast %24 : vector<176x1xf32> to vector<176x64xf32>
      %26 = arith.addf %23, %25 : vector<176x64xf32>
      %cst_16 = arith.constant 0.000000e+00 : f32
      %27 = vector.broadcast %cst_16 : f32 to vector<176x64xf32>
      %28 = arith.maximumf %26, %27 : vector<176x64xf32>
      %c0_17 = arith.constant 0 : index
      %c0_18 = arith.constant 0 : index
      %c0_19 = arith.constant 0 : index
      %29 = vector.load %arg7[%c0_17, %c0_18, %c0_19] : memref<1x176x64xf32, #tpu.memory_space<vmem>>, vector<1x176x64xf32>
      %30 = vector.shape_cast %29 : vector<1x176x64xf32> to vector<176x64xf32>
      %31 = vector.shape_cast %28 : vector<176x64xf32> to vector<1x176x64xf32>
      tpu.vector_store %arg7[%c0_17, %c0_18, %c0_19], %31 {strides = array<i32>} : memref<1x176x64xf32, #tpu.memory_space<vmem>>, vector<1x176x64xf32>,
    } else {
    }
    return
  }
  func.func @transform_0(%arg0: i32, %arg1: i32, %arg2: i32) -> (i32, i32, i32) {
    %c0_i32 = arith.constant 0 : i32
    %c0_i32_0 = arith.constant 0 : i32
    return %arg1, %c0_i32, %arg2 : i32, i32, i32
  }
  func.func @transform_1(%arg0: i32, %arg1: i32, %arg2: i32) -> (i32, i32) {
    %c0_i32 = arith.constant 0 : i32
    %c0_i32_0 = arith.constant 0 : i32
    %c0_i32_1 = arith.constant 0 : i32
    return %c0_i32, %c0_i32_0 : i32, i32
  }
  func.func @transform_2(%arg0: i32, %arg1: i32, %arg2: i32) -> (i32, i32) {
    %c0_i32 = arith.constant 0 : i32
    %c0_i32_0 = arith.constant 0 : i32
    %c0_i32_1 = arith.constant 0 : i32
    return %c0_i32, %c0_i32_0 : i32, i32
  }
  func.func @transform_3(%arg0: i32, %arg1: i32, %arg2: i32) -> (i32, i32) {
    %c0_i32 = arith.constant 0 : i32
    %c0_i32_0 = arith.constant 0 : i32
    %c0_i32_1 = arith.constant 0 : i32
    return %c0_i32, %c0_i32_0 : i32, i32
  }
  func.func @transform_4(%arg0: i32, %arg1: i32, %arg2: i32) -> (i32, i32, i32) {
    %0 = arith.muli %arg1, %arg0 : i32
    %1 = arith.muli %arg2, %arg0 : i32
    %c0_i32 = arith.constant 0 : i32
    %c0_i32_0 = arith.constant 0 : i32
    return %0, %c0_i32, %1 : i32, i32, i32
  }
}

</mosaic_0001>

<llo_original>
// kernel: tpu_custom_call.1
$region0: #{tpu_custom_call.1}
  #allocation0 [shape = 'u32[]', space=smem, size = 0x4, offset = 0x4, fixed_abs, tag = 'smem constant byte address 0x4 - core index']
  #allocation1 [shape = 'u32[72,128]{1,0:T(1,128)}', space=vmem, size = 0x9000, scoped, tag = 'internal scratch']
  #allocation2 [shape = 'f32[176,1]{1,0:T(8,128)}', space=vmem, size = 0x16000, scoped, tag = 'scratch operand']
  #allocation3 [shape = 'f32[176,1]{1,0:T(8,128)}', space=vmem, size = 0x16000, scoped, tag = 'scratch operand']
  #allocation4 [shape = 'f32[176,1]{1,0:T(8,128)}', space=vmem, size = 0x16000, scoped, tag = 'scratch operand']
  #allocation5 [shape = 'f32[176,1]{1,0:T(8,128)}', space=vmem, size = 0x16000, scoped, tag = 'scratch operand']
  %s0 = inlined_call_operand.vmem [shape: f32[2,32,64], index: 0, kind: input, shape index: {}]
  %s1 = inlined_call_operand.vmem [shape: f32[176,32], index: 1, kind: input, shape index: {}]
  %s2 = inlined_call_operand.vmem [shape: f32[176,1], index: 2, kind: input, shape index: {}]
  %s3 = inlined_call_operand.vmem [shape: f32[176,1], index: 3, kind: input, shape index: {}]
  %s4 = inlined_call_operand.vmem [shape: f32[2,176,64], index: 4, kind: output, shape index: {}]
  %s5 = sld [smem:[#allocation0]]
  $region65: #{tpu_custom_call.1} parent=0
    _
  %s7 = ssub.s32 1, %s5
  %s8 = scalar_select 0, %s7, %s5
  loop: start=0, step=1, limit=6
  $region2: #{tpu_custom_call.1} parent=0 // loop_pre_header
    _
  $region3: #{tpu_custom_call.1} parent=0 // loop_header
    %s10 = sphi 0, %s14
    %p11 = scmp.ge.s32.totalorder %s10, 6
    %s17 = sphi 0, %s36
    %s18 = sphi 0, %s32
    %s19 = sphi 0, %s28
    %s20 = sphi 0, %s17
    %s21 = sphi 0, %s18
    %s22 = sphi 0, %s19
    %s23 = sphi 0, %s20
    %s24 = sphi 0, %s21
    %s25 = sphi 0, %s22
    %s41 = sphi 0, %s43
    %s44 = sphi 0, %s41
    %s45 = sphi 0, %s44
    %s61 = sphi 0, %s45
    %s65 = sphi 0, %s65
    %s67 = sphi 0, %s65
    %s68 = sphi 0, %s67
    %s82 = sphi 0, %s68
    %s86 = sphi 0, %s86
    %s88 = sphi 0, %s86
    %s89 = sphi 0, %s88
    %s103 = sphi 0, %s89
    %s107 = sphi 0, %s107
    %s109 = sphi 0, %s107
    %s110 = sphi 0, %s109
    %s124 = sphi 0, %s110
    %s136 = sphi 0, %s138
    %s139 = sphi 0, %s136
    %s140 = sphi 0, %s139
    %s156 = sphi 0, %s140
  $region4: #{tpu_custom_call.1} parent=0 // loop_header_branch
    %13 = sbr.rel (%p11) target = $region8
  $region5: #{tpu_custom_call.1} parent=0 // loop_body
    %s15 = ssub.s32 %s10, 1
    %s16 = ssub.s32 %s10, 2
    %s26 = sadd.s32 1, %s19
    %p27 = scmp.ge.s32.totalorder %s26, 1
    %s28 = scalar_select %p27, 0, %s26
    %s29 = sadd.s32 1, %s18
    %s30 = scalar_select %p27, %s29, %s18
    %p31 = scmp.ge.s32.totalorder %s30, 2
    %s32 = scalar_select %p31, 0, %s30
    %s33 = sadd.s32 1, %s17
    %s34 = scalar_select %p31, %s33, %s17
    %p35 = scmp.ge.s32.totalorder %s34, 2
    %s36 = scalar_select %p35, 0, %s34
    %s37 = ssub.s32 %s18, %s32
    %s38 = ssub.s32 %s19, %s28
    %s39 = sor.u32 %s37, %s38
    %p40 = scmp.eq.s32.totalorder %s39, 0
    %s42 = sadd.s32 %s41, 1
    %s43 = scalar_select %p40, %s41, %s42
    %p46 = pneg %p40
    %p47 = scmp.eq.s32.totalorder %s10, 3
    %p48 = por %p46, %p47
    %p49 = scmp.ne.s32.totalorder %s41, %s44
    %p50 = scmp.eq.s32.totalorder %s10, 0
    %p51 = por %p49, %p50
    %p52 = scmp.ne.s32.totalorder %s41, %s44
    %p53 = scmp.eq.s32.totalorder %s15, 3
    %p54 = por %p52, %p53
    %p55 = scmp.ne.s32.totalorder %s44, %s45
    %p56 = scmp.eq.s32.totalorder %s15, 0
    %p57 = por %p55, %p56
    %p58 = scmp.ne.s32.totalorder %s44, %s45
    %p59 = scmp.eq.s32.totalorder %s16, 3
    %p60 = por %p58, %p59
    %p62 = scmp.ne.s32.totalorder %s45, %s61
    %p63 = scmp.eq.s32.totalorder %s16, 0
    %p64 = por %p62, %p63
    %s66 = sadd.s32 %s65, 1
    %p69 = scmp.eq.s32.totalorder %s10, 3
    %p70 = scmp.ne.s32.totalorder %s65, %s67
    %p71 = scmp.eq.s32.totalorder %s10, 0
    %p72 = por %p70, %p71
    %p73 = scmp.ne.s32.totalorder %s65, %s67
    %p74 = scmp.eq.s32.totalorder %s15, 3
    %p75 = por %p73, %p74
    %p76 = scmp.ne.s32.totalorder %s67, %s68
    %p77 = scmp.eq.s32.totalorder %s15, 0
    %p78 = por %p76, %p77
    %p79 = scmp.ne.s32.totalorder %s67, %s68
    %p80 = scmp.eq.s32.totalorder %s16, 3
    %p81 = por %p79, %p80
    %p83 = scmp.ne.s32.totalorder %s68, %s82
    %p84 = scmp.eq.s32.totalorder %s16, 0
    %p85 = por %p83, %p84
    %s87 = sadd.s32 %s86, 1
    %p90 = scmp.eq.s32.totalorder %s10, 3
    %p91 = scmp.ne.s32.totalorder %s86, %s88
    %p92 = scmp.eq.s32.totalorder %s10, 0
    %p93 = por %p91, %p92
    %p94 = scmp.ne.s32.totalorder %s86, %s88
    %p95 = scmp.eq.s32.totalorder %s15, 3
    %p96 = por %p94, %p95
    %p97 = scmp.ne.s32.totalorder %s88, %s89
    %p98 = scmp.eq.s32.totalorder %s15, 0
    %p99 = por %p97, %p98
    %p100 = scmp.ne.s32.totalorder %s88, %s89
    %p101 = scmp.eq.s32.totalorder %s16, 3
    %p102 = por %p100, %p101
    %p104 = scmp.ne.s32.totalorder %s89, %s103
    %p105 = scmp.eq.s32.totalorder %s16, 0
    %p106 = por %p104, %p105
    %s108 = sadd.s32 %s107, 1
    %p111 = scmp.eq.s32.totalorder %s10, 3
    %p112 = scmp.ne.s32.totalorder %s107, %s109
    %p113 = scmp.eq.s32.totalorder %s10, 0
    %p114 = por %p112, %p113
    %p115 = scmp.ne.s32.totalorder %s107, %s109
    %p116 = scmp.eq.s32.totalorder %s15, 3
    %p117 = por %p115, %p116
    %p118 = scmp.ne.s32.totalorder %s109, %s110
    %p119 = scmp.eq.s32.totalorder %s15, 0
    %p120 = por %p118, %p119
    %p121 = scmp.ne.s32.totalorder %s109, %s110
    %p122 = scmp.eq.s32.totalorder %s16, 3
    %p123 = por %p121, %p122
    %p125 = scmp.ne.s32.totalorder %s110, %s124
    %p126 = scmp.eq.s32.totalorder %s16, 0
    %p127 = por %p125, %p126
    %s128 = smul.u32 %s18, %s17
    %s129 = smul.u32 %s19, %s17
    %s130 = smul.u32 %s32, %s36
    %s131 = smul.u32 %s28, %s36
    %s132 = ssub.s32 %s128, %s130
    %s133 = ssub.s32 %s129, %s131
    %s134 = sor.u32 %s132, %s133
    %p135 = scmp.eq.s32.totalorder %s134, 0
    %s137 = sadd.s32 %s136, 1
    %s138 = scalar_select %p135, %s136, %s137
    %p141 = pneg %p135
    %p142 = scmp.eq.s32.totalorder %s10, 3
    %p143 = por %p141, %p142
    %p144 = scmp.ne.s32.totalorder %s136, %s139
    %p145 = scmp.eq.s32.totalorder %s10, 0
    %p146 = por %p144, %p145
    %p147 = scmp.ne.s32.totalorder %s136, %s139
    %p148 = scmp.eq.s32.totalorder %s15, 3
    %p149 = por %p147, %p148
    %p150 = scmp.ne.s32.totalorder %s139, %s140
    %p151 = scmp.eq.s32.totalorder %s15, 0
    %p152 = por %p150, %p151
    %p153 = scmp.ne.s32.totalorder %s139, %s140
    %p154 = scmp.eq.s32.totalorder %s16, 3
    %p155 = por %p153, %p154
    %p157 = scmp.ne.s32.totalorder %s140, %s156
    %p158 = scmp.eq.s32.totalorder %s16, 0
    %p159 = por %p157, %p158
    %p160 = scmp.le.s32.totalorder 1, %s10
    %p161 = scmp.lt.s32.totalorder %s10, 5
    %p162 = pnand %p160, %p161
    %p163 = pneg %p162
    // Predicated region
    $region9: #{tpu_custom_call.1} parent=5 // pred_check
      _
    $region10: #{tpu_custom_call.1} parent=5 // pred_check_branch
      %165 = sbr.rel (%p162) target = $region12
    $region11: #{tpu_custom_call.1} parent=5 // pred_region
      %s166 = ssub.s32 %s10, 1
      // Predicated region
      $region13: #{tpu_custom_call.1} parent=11 // pred_check
        %p167 = pneg %p78
      $region14: #{tpu_custom_call.1} parent=11 // pred_check_branch
        %169 = sbr.rel (%p167) target = $region16
      $region15: #{tpu_custom_call.1} parent=11 // pred_region
        _
      $region16: #{tpu_custom_call.1} parent=11 // pred_fallthru
        _
      // Predicated region
      $region17: #{tpu_custom_call.1} parent=11 // pred_check
        %p170 = pneg %p99
      $region18: #{tpu_custom_call.1} parent=11 // pred_check_branch
        %172 = sbr.rel (%p170) target = $region20
      $region19: #{tpu_custom_call.1} parent=11 // pred_region
        _
      $region20: #{tpu_custom_call.1} parent=11 // pred_fallthru
        _
      // Predicated region
      $region21: #{tpu_custom_call.1} parent=11 // pred_check
        %p173 = pneg %p120
      $region22: #{tpu_custom_call.1} parent=11 // pred_check_branch
        %175 = sbr.rel (%p173) target = $region24
      $region23: #{tpu_custom_call.1} parent=11 // pred_region
        _
      $region24: #{tpu_custom_call.1} parent=11 // pred_fallthru
        _
    $region12: #{tpu_custom_call.1} parent=5 // pred_fallthru
      _
    %p176 = scmp.lt.s32.totalorder %s10, 4
    // Predicated region
    $region25: #{tpu_custom_call.1} parent=5 // pred_check
      %p177 = pneg %p176
    $region26: #{tpu_custom_call.1} parent=5 // pred_check_branch
      %179 = sbr.rel (%p177) target = $region28
    $region27: #{tpu_custom_call.1} parent=5 // pred_region
      // Predicated region
      $region29: #{tpu_custom_call.1} parent=27 // pred_check
        %p180 = pneg %p51
      $region30: #{tpu_custom_call.1} parent=27 // pred_check_branch
        %182 = sbr.rel (%p180) target = $region32
      $region31: #{tpu_custom_call.1} parent=27 // pred_region
        %p183 = scmp.lt.s32.totalorder %s18, 1
        %s184 = scalar_select %p183, %s18, 1
        %p185 = scmp.lt.s32.totalorder %s19, 0
        %s186 = scalar_select %p185, %s19, 0
        %s187 = smul.addr %s184, 4
        %s188 = sadd.s32 %s186, %s187
        %s189 = smul.addr %s188, 8
        %s190 = scalar_lea.vmem %s0, %s189
      $region32: #{tpu_custom_call.1} parent=27 // pred_fallthru
        _
    $region28: #{tpu_custom_call.1} parent=5 // pred_fallthru
      _
    %p191 = scmp.le.s32.totalorder 1, %s10
    %p192 = scmp.lt.s32.totalorder %s10, 5
    %p193 = pnand %p191, %p192
    %p194 = pneg %p193
    // Predicated region
    $region33: #{tpu_custom_call.1} parent=5 // pred_check
      _
    $region34: #{tpu_custom_call.1} parent=5 // pred_check_branch
      %196 = sbr.rel (%p193) target = $region36
    $region35: #{tpu_custom_call.1} parent=5 // pred_region
      %s197 = ssub.s32 %s10, 1
      %p198 = scmp.lt.s32.totalorder %s21, 1
      %s199 = scalar_select %p198, %s21, 1
      %p200 = scmp.lt.s32.totalorder %s22, 0
      %s201 = scalar_select %p200, %s22, 0
      %s202 = smul.addr %s199, 4
      %s203 = sadd.s32 %s201, %s202
      %s204 = smul.addr %s203, 8
      %s205 = scalar_lea.vmem %s0, %s204
      %p206 = pneg %p57
      %p207 = pneg %p54
      %p208 = pneg %p78
      %p209 = pneg %p75
      %p210 = pneg %p99
      %p211 = pneg %p96
      %p212 = pneg %p120
      %p213 = pneg %p117
      %p214 = pneg %p152
      %p215 = pneg %p149
      %s216 = smul.u32 %s21, %s20
      %s217 = smul.u32 %s22, %s20
      %p218 = scmp.lt.s32.totalorder %s216, 1
      %s219 = scalar_select %p218, %s216, 1
      %p220 = scmp.lt.s32.totalorder %s217, 0
      %s221 = scalar_select %p220, %s217, 0
      %s222 = smul.addr %s219, 22
      %s223 = sadd.s32 %s221, %s222
      %s224 = smul.addr %s223, 8
      %s225 = scalar_lea.vmem %s4, %s224
      %p226 = scmp.lt.s32.totalorder %s21, 1
      %s227 = scalar_select %p226, %s21, 1
      %p228 = scmp.lt.s32.totalorder %s22, 0
      %s229 = scalar_select %p228, %s22, 0
      %s230 = smul.addr %s227, 4
      %s231 = sadd.s32 %s229, %s230
      %s232 = smul.addr %s231, 8
      %s233 = scalar_lea.vmem %s0, %s232
      %s234 = smul.u32 %s21, %s20
      %s235 = smul.u32 %s22, %s20
      %p236 = scmp.lt.s32.totalorder %s234, 1
      %s237 = scalar_select %p236, %s234, 1
      %p238 = scmp.lt.s32.totalorder %s235, 0
      %s239 = scalar_select %p238, %s235, 0
      %s240 = smul.addr %s237, 22
      %s241 = sadd.s32 %s239, %s240
      %s242 = smul.addr %s241, 8
      %s243 = scalar_lea.vmem %s4, %s242
      %s244 = smul.u32 %s21, %s20
      %s245 = smul.u32 %s22, %s20
      %p246 = scmp.eq.s32.totalorder %s21, 0
      %p247 = scmp.eq.s32.totalorder %s22, 0
      %p248 = pnand %p246, %p247
      %p249 = pneg %p248
      %v250 = vld [vmem:[%s1] sm:$0xff]
      %v251 = vld [vmem:[%s1 + $0x8] sm:$0xff]
      %v252 = vld [vmem:[%s1 + $0x10] sm:$0xff]
      %v253 = vld [vmem:[%s1 + $0x18] sm:$0xff]
      %v254 = vld [vmem:[%s1 + $0x20] sm:$0xff]
      %v255 = vld [vmem:[%s1 + $0x28] sm:$0xff]
      %v256 = vld [vmem:[%s1 + $0x30] sm:$0xff]
      %v257 = vld [vmem:[%s1 + $0x38] sm:$0xff]
      %v258 = vld [vmem:[%s1 + $0x40] sm:$0xff]
      %v259 = vld [vmem:[%s1 + $0x48] sm:$0xff]
      %v260 = vld [vmem:[%s1 + $0x50] sm:$0xff]
      %v261 = vld [vmem:[%s1 + $0x58] sm:$0xff]
      %v262 = vld [vmem:[%s1 + $0x60] sm:$0xff]
      %v263 = vld [vmem:[%s1 + $0x68] sm:$0xff]
      %v264 = vld [vmem:[%s1 + $0x70] sm:$0xff]
      %v265 = vld [vmem:[%s1 + $0x78] sm:$0xff]
      %v266 = vld [vmem:[%s1 + $0x80] sm:$0xff]
      %v267 = vld [vmem:[%s1 + $0x88] sm:$0xff]
      %v268 = vld [vmem:[%s1 + $0x90] sm:$0xff]
      %v269 = vld [vmem:[%s1 + $0x98] sm:$0xff]
      %v270 = vld [vmem:[%s1 + $0xa0] sm:$0xff]
      %v271 = vld [vmem:[%s1 + $0xa8] sm:$0xff]
      %v272 = vld [vmem:[%s233] sm:$0xff]
      %v273 = vld [vmem:[%s233 + $0x8] sm:$0xff]
      %v274 = vld [vmem:[%s233 + $0x10] sm:$0xff]
      %v275 = vld [vmem:[%s233 + $0x18] sm:$0xff]
      %vm276 = vcmask 261120
      %v278 = vsel %vm276, %v250, 0
      %v281 = vsel %vm276, %v251, 0
      %v284 = vsel %vm276, %v252, 0
      %v287 = vsel %vm276, %v253, 0
      %v290 = vsel %vm276, %v254, 0
      %v293 = vsel %vm276, %v255, 0
      %v296 = vsel %vm276, %v256, 0
      %v299 = vsel %vm276, %v257, 0
      %v302 = vsel %vm276, %v258, 0
      %v305 = vsel %vm276, %v259, 0
      %v308 = vsel %vm276, %v260, 0
      %v311 = vsel %vm276, %v261, 0
      %v314 = vsel %vm276, %v262, 0
      %v317 = vsel %vm276, %v263, 0
      %v320 = vsel %vm276, %v264, 0
      %v323 = vsel %vm276, %v265, 0
      %v326 = vsel %vm276, %v266, 0
      %v329 = vsel %vm276, %v267, 0
      %v332 = vsel %vm276, %v268, 0
      %v335 = vsel %vm276, %v269, 0
      %v338 = vsel %vm276, %v270, 0
      %v341 = vsel %vm276, %v271, 0
      %343 = vmatpush.msra.mxu0 0.0
      %344 = vmatpush.msra.mxu0 0.0
      %345 = vmatpush.msra.mxu0 0.0
      %346 = vmatpush.msra.mxu0 0.0
      %347 = vmatpush.msra.mxu0 0.0
      %348 = vmatpush.msra.mxu0 0.0
      %349 = vmatpush.msra.mxu0 0.0
      %350 = vmatpush.msra.mxu0 0.0
      %351 = vmatpush.msra.mxu0 0.0
      %352 = vmatpush.msra.mxu0 0.0
      %353 = vmatpush.msra.mxu0 0.0
      %354 = vmatpush.msra.mxu0 0.0
      %355 = vmatpush.msra.mxu0 %v275
      %356 = vmatpush.msra.mxu0 %v274
      %357 = vmatpush.msra.mxu0 %v273
      %358 = vmatpush.msra.mxu0 %v272
      %359 = vmatmul.f32.gmra.mxu0 %v278
      %v360 = vpop.f32.mrf.mxu0
      %v361 = vadd.f32 0.0, %v360
      %362 = vmatmul.f32.gmra.mxu0 %v281
      %v363 = vpop.f32.mrf.mxu0
      %v364 = vadd.f32 0.0, %v363
      %365 = vmatmul.f32.gmra.mxu0 %v284
      %v366 = vpop.f32.mrf.mxu0
      %v367 = vadd.f32 0.0, %v366
      %368 = vmatmul.f32.gmra.mxu0 %v287
      %v369 = vpop.f32.mrf.mxu0
      %v370 = vadd.f32 0.0, %v369
      %371 = vmatmul.f32.gmra.mxu0 %v290
      %v372 = vpop.f32.mrf.mxu0
      %v373 = vadd.f32 0.0, %v372
      %374 = vmatmul.f32.gmra.mxu0 %v293
      %v375 = vpop.f32.mrf.mxu0
      %v376 = vadd.f32 0.0, %v375
      %377 = vmatmul.f32.gmra.mxu0 %v296
      %v378 = vpop.f32.mrf.mxu0
      %v379 = vadd.f32 0.0, %v378
      %380 = vmatmul.f32.gmra.mxu0 %v299
      %v381 = vpop.f32.mrf.mxu0
      %v382 = vadd.f32 0.0, %v381
      %383 = vmatmul.f32.gmra.mxu0 %v302
      %v384 = vpop.f32.mrf.mxu0
      %v385 = vadd.f32 0.0, %v384
      %386 = vmatmul.f32.gmra.mxu0 %v305
      %v387 = vpop.f32.mrf.mxu0
      %v388 = vadd.f32 0.0, %v387
      %389 = vmatmul.f32.gmra.mxu0 %v308
      %v390 = vpop.f32.mrf.mxu0
      %v391 = vadd.f32 0.0, %v390
      %392 = vmatmul.f32.gmra.mxu0 %v311
      %v393 = vpop.f32.mrf.mxu0
      %v394 = vadd.f32 0.0, %v393
      %395 = vmatmul.f32.gmra.mxu0 %v314
      %v396 = vpop.f32.mrf.mxu0
      %v397 = vadd.f32 0.0, %v396
      %398 = vmatmul.f32.gmra.mxu0 %v317
      %v399 = vpop.f32.mrf.mxu0
      %v400 = vadd.f32 0.0, %v399
      %401 = vmatmul.f32.gmra.mxu0 %v320
      %v402 = vpop.f32.mrf.mxu0
      %v403 = vadd.f32 0.0, %v402
      %404 = vmatmul.f32.gmra.mxu0 %v323
      %v405 = vpop.f32.mrf.mxu0
      %v406 = vadd.f32 0.0, %v405
      %407 = vmatmul.f32.gmra.mxu0 %v326
      %v408 = vpop.f32.mrf.mxu0
      %v409 = vadd.f32 0.0, %v408
      %410 = vmatmul.f32.gmra.mxu0 %v329
      %v411 = vpop.f32.mrf.mxu0
      %v412 = vadd.f32 0.0, %v411
      %413 = vmatmul.f32.gmra.mxu0 %v332
      %v414 = vpop.f32.mrf.mxu0
      %v415 = vadd.f32 0.0, %v414
      %416 = vmatmul.f32.gmra.mxu0 %v335
      %v417 = vpop.f32.mrf.mxu0
      %v418 = vadd.f32 0.0, %v417
      %419 = vmatmul.f32.gmra.mxu0 %v338
      %v420 = vpop.f32.mrf.mxu0
      %v421 = vadd.f32 0.0, %v420
      %422 = vmatmul.f32.gmra.mxu0 %v341
      %v423 = vpop.f32.mrf.mxu0
      %v424 = vadd.f32 0.0, %v423
      %425 = vdwg.mxu0
      %p426 = scmp.eq.s32.totalorder %s20, 0
      %p427 = pnand %p426, %p249
      %p428 = pneg %p427
      // Predicated region
      $region37: #{tpu_custom_call.1} parent=35 // pred_check
        _
      $region38: #{tpu_custom_call.1} parent=35 // pred_check_branch
        %430 = sbr.rel (%p427) target = $region40
      $region39: #{tpu_custom_call.1} parent=35 // pred_region
        %vm431 = vcmask 7168
        %432 = vst.msk [vmem:[#allocation2] sm:$0xff] %vm431, 0.0
        %433 = vst.msk [vmem:[#allocation2 + $0x8] sm:$0xff] %vm431, 0.0
        %434 = vst.msk [vmem:[#allocation2 + $0x10] sm:$0xff] %vm431, 0.0
        %435 = vst.msk [vmem:[#allocation2 + $0x18] sm:$0xff] %vm431, 0.0
        %436 = vst.msk [vmem:[#allocation2 + $0x20] sm:$0xff] %vm431, 0.0
        %437 = vst.msk [vmem:[#allocation2 + $0x28] sm:$0xff] %vm431, 0.0
        %438 = vst.msk [vmem:[#allocation2 + $0x30] sm:$0xff] %vm431, 0.0
        %439 = vst.msk [vmem:[#allocation2 + $0x38] sm:$0xff] %vm431, 0.0
        %440 = vst.msk [vmem:[#allocation2 + $0x40] sm:$0xff] %vm431, 0.0
        %441 = vst.msk [vmem:[#allocation2 + $0x48] sm:$0xff] %vm431, 0.0
        %442 = vst.msk [vmem:[#allocation2 + $0x50] sm:$0xff] %vm431, 0.0
        %443 = vst.msk [vmem:[#allocation2 + $0x58] sm:$0xff] %vm431, 0.0
        %444 = vst.msk [vmem:[#allocation2 + $0x60] sm:$0xff] %vm431, 0.0
        %445 = vst.msk [vmem:[#allocation2 + $0x68] sm:$0xff] %vm431, 0.0
        %446 = vst.msk [vmem:[#allocation2 + $0x70] sm:$0xff] %vm431, 0.0
        %447 = vst.msk [vmem:[#allocation2 + $0x78] sm:$0xff] %vm431, 0.0
        %448 = vst.msk [vmem:[#allocation2 + $0x80] sm:$0xff] %vm431, 0.0
        %449 = vst.msk [vmem:[#allocation2 + $0x88] sm:$0xff] %vm431, 0.0
        %450 = vst.msk [vmem:[#allocation2 + $0x90] sm:$0xff] %vm431, 0.0
        %451 = vst.msk [vmem:[#allocation2 + $0x98] sm:$0xff] %vm431, 0.0
        %452 = vst.msk [vmem:[#allocation2 + $0xa0] sm:$0xff] %vm431, 0.0
        %453 = vst.msk [vmem:[#allocation2 + $0xa8] sm:$0xff] %vm431, 0.0
        %454 = vst.msk [vmem:[#allocation3] sm:$0xff] %vm431, 0.0
        %455 = vst.msk [vmem:[#allocation3 + $0x8] sm:$0xff] %vm431, 0.0
        %456 = vst.msk [vmem:[#allocation3 + $0x10] sm:$0xff] %vm431, 0.0
        %457 = vst.msk [vmem:[#allocation3 + $0x18] sm:$0xff] %vm431, 0.0
        %458 = vst.msk [vmem:[#allocation3 + $0x20] sm:$0xff] %vm431, 0.0
        %459 = vst.msk [vmem:[#allocation3 + $0x28] sm:$0xff] %vm431, 0.0
        %460 = vst.msk [vmem:[#allocation3 + $0x30] sm:$0xff] %vm431, 0.0
        %461 = vst.msk [vmem:[#allocation3 + $0x38] sm:$0xff] %vm431, 0.0
        %462 = vst.msk [vmem:[#allocation3 + $0x40] sm:$0xff] %vm431, 0.0
        %463 = vst.msk [vmem:[#allocation3 + $0x48] sm:$0xff] %vm431, 0.0
        %464 = vst.msk [vmem:[#allocation3 + $0x50] sm:$0xff] %vm431, 0.0
        %465 = vst.msk [vmem:[#allocation3 + $0x58] sm:$0xff] %vm431, 0.0
        %466 = vst.msk [vmem:[#allocation3 + $0x60] sm:$0xff] %vm431, 0.0
        %467 = vst.msk [vmem:[#allocation3 + $0x68] sm:$0xff] %vm431, 0.0
        %468 = vst.msk [vmem:[#allocation3 + $0x70] sm:$0xff] %vm431, 0.0
        %469 = vst.msk [vmem:[#allocation3 + $0x78] sm:$0xff] %vm431, 0.0
        %470 = vst.msk [vmem:[#allocation3 + $0x80] sm:$0xff] %vm431, 0.0
        %471 = vst.msk [vmem:[#allocation3 + $0x88] sm:$0xff] %vm431, 0.0
        %472 = vst.msk [vmem:[#allocation3 + $0x90] sm:$0xff] %vm431, 0.0
        %473 = vst.msk [vmem:[#allocation3 + $0x98] sm:$0xff] %vm431, 0.0
        %474 = vst.msk [vmem:[#allocation3 + $0xa0] sm:$0xff] %vm431, 0.0
        %475 = vst.msk [vmem:[#allocation3 + $0xa8] sm:$0xff] %vm431, 0.0
      $region40: #{tpu_custom_call.1} parent=35 // pred_fallthru
        _
      // Predicated region
      $region41: #{tpu_custom_call.1} parent=35 // pred_check
        %p476 = pneg %p426
      $region42: #{tpu_custom_call.1} parent=35 // pred_check_branch
        %478 = sbr.rel (%p476) target = $region44
      $region43: #{tpu_custom_call.1} parent=35 // pred_region
        %v479 = vld [vmem:[#allocation2] sm:$0xff]
        %v480 = vld [vmem:[#allocation2 + $0x8] sm:$0xff]
        %v481 = vld [vmem:[#allocation2 + $0x10] sm:$0xff]
        %v482 = vld [vmem:[#allocation2 + $0x18] sm:$0xff]
        %v483 = vld [vmem:[#allocation2 + $0x20] sm:$0xff]
        %v484 = vld [vmem:[#allocation2 + $0x28] sm:$0xff]
        %v485 = vld [vmem:[#allocation2 + $0x30] sm:$0xff]
        %v486 = vld [vmem:[#allocation2 + $0x38] sm:$0xff]
        %v487 = vld [vmem:[#allocation2 + $0x40] sm:$0xff]
        %v488 = vld [vmem:[#allocation2 + $0x48] sm:$0xff]
        %v489 = vld [vmem:[#allocation2 + $0x50] sm:$0xff]
        %v490 = vld [vmem:[#allocation2 + $0x58] sm:$0xff]
        %v491 = vld [vmem:[#allocation2 + $0x60] sm:$0xff]
        %v492 = vld [vmem:[#allocation2 + $0x68] sm:$0xff]
        %v493 = vld [vmem:[#allocation2 + $0x70] sm:$0xff]
        %v494 = vld [vmem:[#allocation2 + $0x78] sm:$0xff]
        %v495 = vld [vmem:[#allocation2 + $0x80] sm:$0xff]
        %v496 = vld [vmem:[#allocation2 + $0x88] sm:$0xff]
        %v497 = vld [vmem:[#allocation2 + $0x90] sm:$0xff]
        %v498 = vld [vmem:[#allocation2 + $0x98] sm:$0xff]
        %v499 = vld [vmem:[#allocation2 + $0xa0] sm:$0xff]
        %v500 = vld [vmem:[#allocation2 + $0xa8] sm:$0xff]
        %vm501 = vcmask 523264
        %v502 = vsel %vm501, %v361, 0.0
        %503 = vadd.xlane.f32.xlu0 %v502
        %v504 = vpop.xlane.xlu0 %503
        %v505 = vsel %vm501, %v364, 0.0
        %506 = vadd.xlane.f32.xlu0 %v505
        %v507 = vpop.xlane.xlu0 %506
        %v508 = vsel %vm501, %v367, 0.0
        %509 = vadd.xlane.f32.xlu0 %v508
        %v510 = vpop.xlane.xlu0 %509
        %v511 = vsel %vm501, %v370, 0.0
        %512 = vadd.xlane.f32.xlu0 %v511
        %v513 = vpop.xlane.xlu0 %512
        %v514 = vsel %vm501, %v373, 0.0
        %515 = vadd.xlane.f32.xlu0 %v514
        %v516 = vpop.xlane.xlu0 %515
        %v517 = vsel %vm501, %v376, 0.0
        %518 = vadd.xlane.f32.xlu0 %v517
        %v519 = vpop.xlane.xlu0 %518
        %v520 = vsel %vm501, %v379, 0.0
        %521 = vadd.xlane.f32.xlu0 %v520
        %v522 = vpop.xlane.xlu0 %521
        %v523 = vsel %vm501, %v382, 0.0
        %524 = vadd.xlane.f32.xlu0 %v523
        %v525 = vpop.xlane.xlu0 %524
        %v526 = vsel %vm501, %v385, 0.0
        %527 = vadd.xlane.f32.xlu0 %v526
        %v528 = vpop.xlane.xlu0 %527
        %v529 = vsel %vm501, %v388, 0.0
        %530 = vadd.xlane.f32.xlu0 %v529
        %v531 = vpop.xlane.xlu0 %530
        %v532 = vsel %vm501, %v391, 0.0
        %533 = vadd.xlane.f32.xlu0 %v532
        %v534 = vpop.xlane.xlu0 %533
        %v535 = vsel %vm501, %v394, 0.0
        %536 = vadd.xlane.f32.xlu0 %v535
        %v537 = vpop.xlane.xlu0 %536
        %v538 = vsel %vm501, %v397, 0.0
        %539 = vadd.xlane.f32.xlu0 %v538
        %v540 = vpop.xlane.xlu0 %539
        %v541 = vsel %vm501, %v400, 0.0
        %542 = vadd.xlane.f32.xlu0 %v541
        %v543 = vpop.xlane.xlu0 %542
        %v544 = vsel %vm501, %v403, 0.0
        %545 = vadd.xlane.f32.xlu0 %v544
        %v546 = vpop.xlane.xlu0 %545
        %v547 = vsel %vm501, %v406, 0.0
        %548 = vadd.xlane.f32.xlu0 %v547
        %v549 = vpop.xlane.xlu0 %548
        %v550 = vsel %vm501, %v409, 0.0
        %551 = vadd.xlane.f32.xlu0 %v550
        %v552 = vpop.xlane.xlu0 %551
        %v553 = vsel %vm501, %v412, 0.0
        %554 = vadd.xlane.f32.xlu0 %v553
        %v555 = vpop.xlane.xlu0 %554
        %v556 = vsel %vm501, %v415, 0.0
        %557 = vadd.xlane.f32.xlu0 %v556
        %v558 = vpop.xlane.xlu0 %557
        %v559 = vsel %vm501, %v418, 0.0
        %560 = vadd.xlane.f32.xlu0 %v559
        %v561 = vpop.xlane.xlu0 %560
        %v562 = vsel %vm501, %v421, 0.0
        %563 = vadd.xlane.f32.xlu0 %v562
        %v564 = vpop.xlane.xlu0 %563
        %v565 = vsel %vm501, %v424, 0.0
        %566 = vadd.xlane.f32.xlu0 %v565
        %v567 = vpop.xlane.xlu0 %566
        %v568 = vadd.f32 %v479, %v504
        %v569 = vadd.f32 %v480, %v507
        %v570 = vadd.f32 %v481, %v510
        %v571 = vadd.f32 %v482, %v513
        %v572 = vadd.f32 %v483, %v516
        %v573 = vadd.f32 %v484, %v519
        %v574 = vadd.f32 %v485, %v522
        %v575 = vadd.f32 %v486, %v525
        %v576 = vadd.f32 %v487, %v528
        %v577 = vadd.f32 %v488, %v531
        %v578 = vadd.f32 %v489, %v534
        %v579 = vadd.f32 %v490, %v537
        %v580 = vadd.f32 %v491, %v540
        %v581 = vadd.f32 %v492, %v543
        %v582 = vadd.f32 %v493, %v546
        %v583 = vadd.f32 %v494, %v549
        %v584 = vadd.f32 %v495, %v552
        %v585 = vadd.f32 %v496, %v555
        %v586 = vadd.f32 %v497, %v558
        %v587 = vadd.f32 %v498, %v561
        %v588 = vadd.f32 %v499, %v564
        %v589 = vadd.f32 %v500, %v567
        %vm590 = vcmask 7168
        %591 = vst.msk [vmem:[#allocation2] sm:$0xff] %vm590, %v568
        %592 = vst.msk [vmem:[#allocation2 + $0x8] sm:$0xff] %vm590, %v569
        %593 = vst.msk [vmem:[#allocation2 + $0x10] sm:$0xff] %vm590, %v570
        %594 = vst.msk [vmem:[#allocation2 + $0x18] sm:$0xff] %vm590, %v571
        %595 = vst.msk [vmem:[#allocation2 + $0x20] sm:$0xff] %vm590, %v572
        %596 = vst.msk [vmem:[#allocation2 + $0x28] sm:$0xff] %vm590, %v573
        %597 = vst.msk [vmem:[#allocation2 + $0x30] sm:$0xff] %vm590, %v574
        %598 = vst.msk [vmem:[#allocation2 + $0x38] sm:$0xff] %vm590, %v575
        %599 = vst.msk [vmem:[#allocation2 + $0x40] sm:$0xff] %vm590, %v576
        %600 = vst.msk [vmem:[#allocation2 + $0x48] sm:$0xff] %vm590, %v577
        %601 = vst.msk [vmem:[#allocation2 + $0x50] sm:$0xff] %vm590, %v578
        %602 = vst.msk [vmem:[#allocation2 + $0x58] sm:$0xff] %vm590, %v579
        %603 = vst.msk [vmem:[#allocation2 + $0x60] sm:$0xff] %vm590, %v580
        %604 = vst.msk [vmem:[#allocation2 + $0x68] sm:$0xff] %vm590, %v581
        %605 = vst.msk [vmem:[#allocation2 + $0x70] sm:$0xff] %vm590, %v582
        %606 = vst.msk [vmem:[#allocation2 + $0x78] sm:$0xff] %vm590, %v583
        %607 = vst.msk [vmem:[#allocation2 + $0x80] sm:$0xff] %vm590, %v584
        %608 = vst.msk [vmem:[#allocation2 + $0x88] sm:$0xff] %vm590, %v585
        %609 = vst.msk [vmem:[#allocation2 + $0x90] sm:$0xff] %vm590, %v586
        %610 = vst.msk [vmem:[#allocation2 + $0x98] sm:$0xff] %vm590, %v587
        %611 = vst.msk [vmem:[#allocation2 + $0xa0] sm:$0xff] %vm590, %v588
        %612 = vst.msk [vmem:[#allocation2 + $0xa8] sm:$0xff] %vm590, %v589
        %v613 = vld [vmem:[#allocation3] sm:$0xff]
        %v614 = vld [vmem:[#allocation3 + $0x8] sm:$0xff]
        %v615 = vld [vmem:[#allocation3 + $0x10] sm:$0xff]
        %v616 = vld [vmem:[#allocation3 + $0x18] sm:$0xff]
        %v617 = vld [vmem:[#allocation3 + $0x20] sm:$0xff]
        %v618 = vld [vmem:[#allocation3 + $0x28] sm:$0xff]
        %v619 = vld [vmem:[#allocation3 + $0x30] sm:$0xff]
        %v620 = vld [vmem:[#allocation3 + $0x38] sm:$0xff]
        %v621 = vld [vmem:[#allocation3 + $0x40] sm:$0xff]
        %v622 = vld [vmem:[#allocation3 + $0x48] sm:$0xff]
        %v623 = vld [vmem:[#allocation3 + $0x50] sm:$0xff]
        %v624 = vld [vmem:[#allocation3 + $0x58] sm:$0xff]
        %v625 = vld [vmem:[#allocation3 + $0x60] sm:$0xff]
        %v626 = vld [vmem:[#allocation3 + $0x68] sm:$0xff]
        %v627 = vld [vmem:[#allocation3 + $0x70] sm:$0xff]
        %v628 = vld [vmem:[#allocation3 + $0x78] sm:$0xff]
        %v629 = vld [vmem:[#allocation3 + $0x80] sm:$0xff]
        %v630 = vld [vmem:[#allocation3 + $0x88] sm:$0xff]
        %v631 = vld [vmem:[#allocation3 + $0x90] sm:$0xff]
        %v632 = vld [vmem:[#allocation3 + $0x98] sm:$0xff]
        %v633 = vld [vmem:[#allocation3 + $0xa0] sm:$0xff]
        %v634 = vld [vmem:[#allocation3 + $0xa8] sm:$0xff]
        %v635 = vmul.f32 %v361, %v361
        %v636 = vmul.f32 %v364, %v364
        %v637 = vmul.f32 %v367, %v367
        %v638 = vmul.f32 %v370, %v370
        %v639 = vmul.f32 %v373, %v373
        %v640 = vmul.f32 %v376, %v376
        %v641 = vmul.f32 %v379, %v379
        %v642 = vmul.f32 %v382, %v382
        %v643 = vmul.f32 %v385, %v385
        %v644 = vmul.f32 %v388, %v388
        %v645 = vmul.f32 %v391, %v391
        %v646 = vmul.f32 %v394, %v394
        %v647 = vmul.f32 %v397, %v397
        %v648 = vmul.f32 %v400, %v400
        %v649 = vmul.f32 %v403, %v403
        %v650 = vmul.f32 %v406, %v406
        %v651 = vmul.f32 %v409, %v409
        %v652 = vmul.f32 %v412, %v412
        %v653 = vmul.f32 %v415, %v415
        %v654 = vmul.f32 %v418, %v418
        %v655 = vmul.f32 %v421, %v421
        %v656 = vmul.f32 %v424, %v424
        %v657 = vsel %vm501, %v635, 0.0
        %658 = vadd.xlane.f32.xlu0 %v657
        %v659 = vpop.xlane.xlu0 %658
        %v660 = vsel %vm501, %v636, 0.0
        %661 = vadd.xlane.f32.xlu0 %v660
        %v662 = vpop.xlane.xlu0 %661
        %v663 = vsel %vm501, %v637, 0.0
        %664 = vadd.xlane.f32.xlu0 %v663
        %v665 = vpop.xlane.xlu0 %664
        %v666 = vsel %vm501, %v638, 0.0
        %667 = vadd.xlane.f32.xlu0 %v666
        %v668 = vpop.xlane.xlu0 %667
        %v669 = vsel %vm501, %v639, 0.0
        %670 = vadd.xlane.f32.xlu0 %v669
        %v671 = vpop.xlane.xlu0 %670
        %v672 = vsel %vm501, %v640, 0.0
        %673 = vadd.xlane.f32.xlu0 %v672
        %v674 = vpop.xlane.xlu0 %673
        %v675 = vsel %vm501, %v641, 0.0
        %676 = vadd.xlane.f32.xlu0 %v675
        %v677 = vpop.xlane.xlu0 %676
        %v678 = vsel %vm501, %v642, 0.0
        %679 = vadd.xlane.f32.xlu0 %v678
        %v680 = vpop.xlane.xlu0 %679
        %v681 = vsel %vm501, %v643, 0.0
        %682 = vadd.xlane.f32.xlu0 %v681
        %v683 = vpop.xlane.xlu0 %682
        %v684 = vsel %vm501, %v644, 0.0
        %685 = vadd.xlane.f32.xlu0 %v684
        %v686 = vpop.xlane.xlu0 %685
        %v687 = vsel %vm501, %v645, 0.0
        %688 = vadd.xlane.f32.xlu0 %v687
        %v689 = vpop.xlane.xlu0 %688
        %v690 = vsel %vm501, %v646, 0.0
        %691 = vadd.xlane.f32.xlu0 %v690
        %v692 = vpop.xlane.xlu0 %691
        %v693 = vsel %vm501, %v647, 0.0
        %694 = vadd.xlane.f32.xlu0 %v693
        %v695 = vpop.xlane.xlu0 %694
        %v696 = vsel %vm501, %v648, 0.0
        %697 = vadd.xlane.f32.xlu0 %v696
        %v698 = vpop.xlane.xlu0 %697
        %v699 = vsel %vm501, %v649, 0.0
        %700 = vadd.xlane.f32.xlu0 %v699
        %v701 = vpop.xlane.xlu0 %700
        %v702 = vsel %vm501, %v650, 0.0
        %703 = vadd.xlane.f32.xlu0 %v702
        %v704 = vpop.xlane.xlu0 %703
        %v705 = vsel %vm501, %v651, 0.0
        %706 = vadd.xlane.f32.xlu0 %v705
        %v707 = vpop.xlane.xlu0 %706
        %v708 = vsel %vm501, %v652, 0.0
        %709 = vadd.xlane.f32.xlu0 %v708
        %v710 = vpop.xlane.xlu0 %709
        %v711 = vsel %vm501, %v653, 0.0
        %712 = vadd.xlane.f32.xlu0 %v711
        %v713 = vpop.xlane.xlu0 %712
        %v714 = vsel %vm501, %v654, 0.0
        %715 = vadd.xlane.f32.xlu0 %v714
        %v716 = vpop.xlane.xlu0 %715
        %v717 = vsel %vm501, %v655, 0.0
        %718 = vadd.xlane.f32.xlu0 %v717
        %v719 = vpop.xlane.xlu0 %718
        %v720 = vsel %vm501, %v656, 0.0
        %721 = vadd.xlane.f32.xlu0 %v720
        %v722 = vpop.xlane.xlu0 %721
        %v723 = vadd.f32 %v613, %v659
        %v724 = vadd.f32 %v614, %v662
        %v725 = vadd.f32 %v615, %v665
        %v726 = vadd.f32 %v616, %v668
        %v727 = vadd.f32 %v617, %v671
        %v728 = vadd.f32 %v618, %v674
        %v729 = vadd.f32 %v619, %v677
        %v730 = vadd.f32 %v620, %v680
        %v731 = vadd.f32 %v621, %v683
        %v732 = vadd.f32 %v622, %v686
        %v733 = vadd.f32 %v623, %v689
        %v734 = vadd.f32 %v624, %v692
        %v735 = vadd.f32 %v625, %v695
        %v736 = vadd.f32 %v626, %v698
        %v737 = vadd.f32 %v627, %v701
        %v738 = vadd.f32 %v628, %v704
        %v739 = vadd.f32 %v629, %v707
        %v740 = vadd.f32 %v630, %v710
        %v741 = vadd.f32 %v631, %v713
        %v742 = vadd.f32 %v632, %v716
        %v743 = vadd.f32 %v633, %v719
        %v744 = vadd.f32 %v634, %v722
        %745 = vst.msk [vmem:[#allocation3] sm:$0xff] %vm590, %v723
        %746 = vst.msk [vmem:[#allocation3 + $0x8] sm:$0xff] %vm590, %v724
        %747 = vst.msk [vmem:[#allocation3 + $0x10] sm:$0xff] %vm590, %v725
        %748 = vst.msk [vmem:[#allocation3 + $0x18] sm:$0xff] %vm590, %v726
        %749 = vst.msk [vmem:[#allocation3 + $0x20] sm:$0xff] %vm590, %v727
        %750 = vst.msk [vmem:[#allocation3 + $0x28] sm:$0xff] %vm590, %v728
        %751 = vst.msk [vmem:[#allocation3 + $0x30] sm:$0xff] %vm590, %v729
        %752 = vst.msk [vmem:[#allocation3 + $0x38] sm:$0xff] %vm590, %v730
        %753 = vst.msk [vmem:[#allocation3 + $0x40] sm:$0xff] %vm590, %v731
        %754 = vst.msk [vmem:[#allocation3 + $0x48] sm:$0xff] %vm590, %v732
        %755 = vst.msk [vmem:[#allocation3 + $0x50] sm:$0xff] %vm590, %v733
        %756 = vst.msk [vmem:[#allocation3 + $0x58] sm:$0xff] %vm590, %v734
        %757 = vst.msk [vmem:[#allocation3 + $0x60] sm:$0xff] %vm590, %v735
        %758 = vst.msk [vmem:[#allocation3 + $0x68] sm:$0xff] %vm590, %v736
        %759 = vst.msk [vmem:[#allocation3 + $0x70] sm:$0xff] %vm590, %v737
        %760 = vst.msk [vmem:[#allocation3 + $0x78] sm:$0xff] %vm590, %v738
        %761 = vst.msk [vmem:[#allocation3 + $0x80] sm:$0xff] %vm590, %v739
        %762 = vst.msk [vmem:[#allocation3 + $0x88] sm:$0xff] %vm590, %v740
        %763 = vst.msk [vmem:[#allocation3 + $0x90] sm:$0xff] %vm590, %v741
        %764 = vst.msk [vmem:[#allocation3 + $0x98] sm:$0xff] %vm590, %v742
        %765 = vst.msk [vmem:[#allocation3 + $0xa0] sm:$0xff] %vm590, %v743
        %766 = vst.msk [vmem:[#allocation3 + $0xa8] sm:$0xff] %vm590, %v744
      $region44: #{tpu_custom_call.1} parent=35 // pred_fallthru
        _
      %p767 = scmp.eq.s32.totalorder %s20, 1
      %p768 = pnand %p767, %p249
      %p769 = pneg %p768
      // Predicated region
      $region45: #{tpu_custom_call.1} parent=35 // pred_check
        _
      $region46: #{tpu_custom_call.1} parent=35 // pred_check_branch
        %771 = sbr.rel (%p768) target = $region48
      $region47: #{tpu_custom_call.1} parent=35 // pred_region
        %v772 = vld [vmem:[#allocation2] sm:$0xff]
        %v773 = vld [vmem:[#allocation2 + $0x8] sm:$0xff]
        %v774 = vld [vmem:[#allocation2 + $0x10] sm:$0xff]
        %v775 = vld [vmem:[#allocation2 + $0x18] sm:$0xff]
        %v776 = vld [vmem:[#allocation2 + $0x20] sm:$0xff]
        %v777 = vld [vmem:[#allocation2 + $0x28] sm:$0xff]
        %v778 = vld [vmem:[#allocation2 + $0x30] sm:$0xff]
        %v779 = vld [vmem:[#allocation2 + $0x38] sm:$0xff]
        %v780 = vld [vmem:[#allocation2 + $0x40] sm:$0xff]
        %v781 = vld [vmem:[#allocation2 + $0x48] sm:$0xff]
        %v782 = vld [vmem:[#allocation2 + $0x50] sm:$0xff]
        %v783 = vld [vmem:[#allocation2 + $0x58] sm:$0xff]
        %v784 = vld [vmem:[#allocation2 + $0x60] sm:$0xff]
        %v785 = vld [vmem:[#allocation2 + $0x68] sm:$0xff]
        %v786 = vld [vmem:[#allocation2 + $0x70] sm:$0xff]
        %v787 = vld [vmem:[#allocation2 + $0x78] sm:$0xff]
        %v788 = vld [vmem:[#allocation2 + $0x80] sm:$0xff]
        %v789 = vld [vmem:[#allocation2 + $0x88] sm:$0xff]
        %v790 = vld [vmem:[#allocation2 + $0x90] sm:$0xff]
        %v791 = vld [vmem:[#allocation2 + $0x98] sm:$0xff]
        %v792 = vld [vmem:[#allocation2 + $0xa0] sm:$0xff]
        %v793 = vld [vmem:[#allocation2 + $0xa8] sm:$0xff]
        %v794 = vmul.f32 %v772, 0.0078125
        %v795 = vmul.f32 %v773, 0.0078125
        %v796 = vmul.f32 %v774, 0.0078125
        %v797 = vmul.f32 %v775, 0.0078125
        %v798 = vmul.f32 %v776, 0.0078125
        %v799 = vmul.f32 %v777, 0.0078125
        %v800 = vmul.f32 %v778, 0.0078125
        %v801 = vmul.f32 %v779, 0.0078125
        %v802 = vmul.f32 %v780, 0.0078125
        %v803 = vmul.f32 %v781, 0.0078125
        %v804 = vmul.f32 %v782, 0.0078125
        %v805 = vmul.f32 %v783, 0.0078125
        %v806 = vmul.f32 %v784, 0.0078125
        %v807 = vmul.f32 %v785, 0.0078125
        %v808 = vmul.f32 %v786, 0.0078125
        %v809 = vmul.f32 %v787, 0.0078125
        %v810 = vmul.f32 %v788, 0.0078125
        %v811 = vmul.f32 %v789, 0.0078125
        %v812 = vmul.f32 %v790, 0.0078125
        %v813 = vmul.f32 %v791, 0.0078125
        %v814 = vmul.f32 %v792, 0.0078125
        %v815 = vmul.f32 %v793, 0.0078125
        %v816 = vld [vmem:[#allocation3] sm:$0xff]
        %v817 = vld [vmem:[#allocation3 + $0x8] sm:$0xff]
        %v818 = vld [vmem:[#allocation3 + $0x10] sm:$0xff]
        %v819 = vld [vmem:[#allocation3 + $0x18] sm:$0xff]
        %v820 = vld [vmem:[#allocation3 + $0x20] sm:$0xff]
        %v821 = vld [vmem:[#allocation3 + $0x28] sm:$0xff]
        %v822 = vld [vmem:[#allocation3 + $0x30] sm:$0xff]
        %v823 = vld [vmem:[#allocation3 + $0x38] sm:$0xff]
        %v824 = vld [vmem:[#allocation3 + $0x40] sm:$0xff]
        %v825 = vld [vmem:[#allocation3 + $0x48] sm:$0xff]
        %v826 = vld [vmem:[#allocation3 + $0x50] sm:$0xff]
        %v827 = vld [vmem:[#allocation3 + $0x58] sm:$0xff]
        %v828 = vld [vmem:[#allocation3 + $0x60] sm:$0xff]
        %v829 = vld [vmem:[#allocation3 + $0x68] sm:$0xff]
        %v830 = vld [vmem:[#allocation3 + $0x70] sm:$0xff]
        %v831 = vld [vmem:[#allocation3 + $0x78] sm:$0xff]
        %v832 = vld [vmem:[#allocation3 + $0x80] sm:$0xff]
        %v833 = vld [vmem:[#allocation3 + $0x88] sm:$0xff]
        %v834 = vld [vmem:[#allocation3 + $0x90] sm:$0xff]
        %v835 = vld [vmem:[#allocation3 + $0x98] sm:$0xff]
        %v836 = vld [vmem:[#allocation3 + $0xa0] sm:$0xff]
        %v837 = vld [vmem:[#allocation3 + $0xa8] sm:$0xff]
        %v838 = vmul.f32 %v816, 0.0078125
        %v839 = vmul.f32 %v817, 0.0078125
        %v840 = vmul.f32 %v818, 0.0078125
        %v841 = vmul.f32 %v819, 0.0078125
        %v842 = vmul.f32 %v820, 0.0078125
        %v843 = vmul.f32 %v821, 0.0078125
        %v844 = vmul.f32 %v822, 0.0078125
        %v845 = vmul.f32 %v823, 0.0078125
        %v846 = vmul.f32 %v824, 0.0078125
        %v847 = vmul.f32 %v825, 0.0078125
        %v848 = vmul.f32 %v826, 0.0078125
        %v849 = vmul.f32 %v827, 0.0078125
        %v850 = vmul.f32 %v828, 0.0078125
        %v851 = vmul.f32 %v829, 0.0078125
        %v852 = vmul.f32 %v830, 0.0078125
        %v853 = vmul.f32 %v831, 0.0078125
        %v854 = vmul.f32 %v832, 0.0078125
        %v855 = vmul.f32 %v833, 0.0078125
        %v856 = vmul.f32 %v834, 0.0078125
        %v857 = vmul.f32 %v835, 0.0078125
        %v858 = vmul.f32 %v836, 0.0078125
        %v859 = vmul.f32 %v837, 0.0078125
        %v860 = vmul.f32 %v794, %v794
        %v861 = vmul.f32 %v795, %v795
        %v862 = vmul.f32 %v796, %v796
        %v863 = vmul.f32 %v797, %v797
        %v864 = vmul.f32 %v798, %v798
        %v865 = vmul.f32 %v799, %v799
        %v866 = vmul.f32 %v800, %v800
        %v867 = vmul.f32 %v801, %v801
        %v868 = vmul.f32 %v802, %v802
        %v869 = vmul.f32 %v803, %v803
        %v870 = vmul.f32 %v804, %v804
        %v871 = vmul.f32 %v805, %v805
        %v872 = vmul.f32 %v806, %v806
        %v873 = vmul.f32 %v807, %v807
        %v874 = vmul.f32 %v808, %v808
        %v875 = vmul.f32 %v809, %v809
        %v876 = vmul.f32 %v810, %v810
        %v877 = vmul.f32 %v811, %v811
        %v878 = vmul.f32 %v812, %v812
        %v879 = vmul.f32 %v813, %v813
        %v880 = vmul.f32 %v814, %v814
        %v881 = vmul.f32 %v815, %v815
        %v882 = vsub.f32 %v838, %v860
        %v883 = vsub.f32 %v839, %v861
        %v884 = vsub.f32 %v840, %v862
        %v885 = vsub.f32 %v841, %v863
        %v886 = vsub.f32 %v842, %v864
        %v887 = vsub.f32 %v843, %v865
        %v888 = vsub.f32 %v844, %v866
        %v889 = vsub.f32 %v845, %v867
        %v890 = vsub.f32 %v846, %v868
        %v891 = vsub.f32 %v847, %v869
        %v892 = vsub.f32 %v848, %v870
        %v893 = vsub.f32 %v849, %v871
        %v894 = vsub.f32 %v850, %v872
        %v895 = vsub.f32 %v851, %v873
        %v896 = vsub.f32 %v852, %v874
        %v897 = vsub.f32 %v853, %v875
        %v898 = vsub.f32 %v854, %v876
        %v899 = vsub.f32 %v855, %v877
        %v900 = vsub.f32 %v856, %v878
        %v901 = vsub.f32 %v857, %v879
        %v902 = vsub.f32 %v858, %v880
        %v903 = vsub.f32 %v859, %v881
        %v904 = vmax.f32 %v882, 0.0
        %v905 = vmax.f32 %v883, 0.0
        %v906 = vmax.f32 %v884, 0.0
        %v907 = vmax.f32 %v885, 0.0
        %v908 = vmax.f32 %v886, 0.0
        %v909 = vmax.f32 %v887, 0.0
        %v910 = vmax.f32 %v888, 0.0
        %v911 = vmax.f32 %v889, 0.0
        %v912 = vmax.f32 %v890, 0.0
        %v913 = vmax.f32 %v891, 0.0
        %v914 = vmax.f32 %v892, 0.0
        %v915 = vmax.f32 %v893, 0.0
        %v916 = vmax.f32 %v894, 0.0
        %v917 = vmax.f32 %v895, 0.0
        %v918 = vmax.f32 %v896, 0.0
        %v919 = vmax.f32 %v897, 0.0
        %v920 = vmax.f32 %v898, 0.0
        %v921 = vmax.f32 %v899, 0.0
        %v922 = vmax.f32 %v900, 0.0
        %v923 = vmax.f32 %v901, 0.0
        %v924 = vmax.f32 %v902, 0.0
        %v925 = vmax.f32 %v903, 0.0
        %v926 = vadd.f32 %v904, 1e-05
        %v927 = vadd.f32 %v905, 1e-05
        %v928 = vadd.f32 %v906, 1e-05
        %v929 = vadd.f32 %v907, 1e-05
        %v930 = vadd.f32 %v908, 1e-05
        %v931 = vadd.f32 %v909, 1e-05
        %v932 = vadd.f32 %v910, 1e-05
        %v933 = vadd.f32 %v911, 1e-05
        %v934 = vadd.f32 %v912, 1e-05
        %v935 = vadd.f32 %v913, 1e-05
        %v936 = vadd.f32 %v914, 1e-05
        %v937 = vadd.f32 %v915, 1e-05
        %v938 = vadd.f32 %v916, 1e-05
        %v939 = vadd.f32 %v917, 1e-05
        %v940 = vadd.f32 %v918, 1e-05
        %v941 = vadd.f32 %v919, 1e-05
        %v942 = vadd.f32 %v920, 1e-05
        %v943 = vadd.f32 %v921, 1e-05
        %v944 = vadd.f32 %v922, 1e-05
        %v945 = vadd.f32 %v923, 1e-05
        %v946 = vadd.f32 %v924, 1e-05
        %v947 = vadd.f32 %v925, 1e-05
        %v948 = vrsqrt.pop %v926
        %v949 = vmul.f32 %v948, %v926
        %v950 = vmul.f32 %v949, %v948
        %v951 = vmul.f32 0.5, %v950
        %v952 = vsub.f32 1.5, %v951
        %v953 = vmul.f32 %v948, %v952
        %vm954 = vweird.f32 %v926
        %vm955 = vweird.f32 %v948
        %vm956 = vmor %vm954, %vm955
        %v957 = vsel %vm956, %v948, %v953
        %v958 = vrsqrt.pop %v927
        %v959 = vmul.f32 %v958, %v927
        %v960 = vmul.f32 %v959, %v958
        %v961 = vmul.f32 0.5, %v960
        %v962 = vsub.f32 1.5, %v961
        %v963 = vmul.f32 %v958, %v962
        %vm964 = vweird.f32 %v927
        %vm965 = vweird.f32 %v958
        %vm966 = vmor %vm964, %vm965
        %v967 = vsel %vm966, %v958, %v963
        %v968 = vrsqrt.pop %v928
        %v969 = vmul.f32 %v968, %v928
        %v970 = vmul.f32 %v969, %v968
        %v971 = vmul.f32 0.5, %v970
        %v972 = vsub.f32 1.5, %v971
        %v973 = vmul.f32 %v968, %v972
        %vm974 = vweird.f32 %v928
        %vm975 = vweird.f32 %v968
        %vm976 = vmor %vm974, %vm975
        %v977 = vsel %vm976, %v968, %v973
        %v978 = vrsqrt.pop %v929
        %v979 = vmul.f32 %v978, %v929
        %v980 = vmul.f32 %v979, %v978
        %v981 = vmul.f32 0.5, %v980
        %v982 = vsub.f32 1.5, %v981
        %v983 = vmul.f32 %v978, %v982
        %vm984 = vweird.f32 %v929
        %vm985 = vweird.f32 %v978
        %vm986 = vmor %vm984, %vm985
        %v987 = vsel %vm986, %v978, %v983
        %v988 = vrsqrt.pop %v930
        %v989 = vmul.f32 %v988, %v930
        %v990 = vmul.f32 %v989, %v988
        %v991 = vmul.f32 0.5, %v990
        %v992 = vsub.f32 1.5, %v991
        %v993 = vmul.f32 %v988, %v992
        %vm994 = vweird.f32 %v930
        %vm995 = vweird.f32 %v988
        %vm996 = vmor %vm994, %vm995
        %v997 = vsel %vm996, %v988, %v993
        %v998 = vrsqrt.pop %v931
        %v999 = vmul.f32 %v998, %v931
        %v1000 = vmul.f32 %v999, %v998
        %v1001 = vmul.f32 0.5, %v1000
        %v1002 = vsub.f32 1.5, %v1001
        %v1003 = vmul.f32 %v998, %v1002
        %vm1004 = vweird.f32 %v931
        %vm1005 = vweird.f32 %v998
        %vm1006 = vmor %vm1004, %vm1005
        %v1007 = vsel %vm1006, %v998, %v1003
        %v1008 = vrsqrt.pop %v932
        %v1009 = vmul.f32 %v1008, %v932
        %v1010 = vmul.f32 %v1009, %v1008
        %v1011 = vmul.f32 0.5, %v1010
        %v1012 = vsub.f32 1.5, %v1011
        %v1013 = vmul.f32 %v1008, %v1012
        %vm1014 = vweird.f32 %v932
        %vm1015 = vweird.f32 %v1008
        %vm1016 = vmor %vm1014, %vm1015
        %v1017 = vsel %vm1016, %v1008, %v1013
        %v1018 = vrsqrt.pop %v933
        %v1019 = vmul.f32 %v1018, %v933
        %v1020 = vmul.f32 %v1019, %v1018
        %v1021 = vmul.f32 0.5, %v1020
        %v1022 = vsub.f32 1.5, %v1021
        %v1023 = vmul.f32 %v1018, %v1022
        %vm1024 = vweird.f32 %v933
        %vm1025 = vweird.f32 %v1018
        %vm1026 = vmor %vm1024, %vm1025
        %v1027 = vsel %vm1026, %v1018, %v1023
        %v1028 = vrsqrt.pop %v934
        %v1029 = vmul.f32 %v1028, %v934
        %v1030 = vmul.f32 %v1029, %v1028
        %v1031 = vmul.f32 0.5, %v1030
        %v1032 = vsub.f32 1.5, %v1031
        %v1033 = vmul.f32 %v1028, %v1032
        %vm1034 = vweird.f32 %v934
        %vm1035 = vweird.f32 %v1028
        %vm1036 = vmor %vm1034, %vm1035
        %v1037 = vsel %vm1036, %v1028, %v1033
        %v1038 = vrsqrt.pop %v935
        %v1039 = vmul.f32 %v1038, %v935
        %v1040 = vmul.f32 %v1039, %v1038
        %v1041 = vmul.f32 0.5, %v1040
        %v1042 = vsub.f32 1.5, %v1041
        %v1043 = vmul.f32 %v1038, %v1042
        %vm1044 = vweird.f32 %v935
        %vm1045 = vweird.f32 %v1038
        %vm1046 = vmor %vm1044, %vm1045
        %v1047 = vsel %vm1046, %v1038, %v1043
        %v1048 = vrsqrt.pop %v936
        %v1049 = vmul.f32 %v1048, %v936
        %v1050 = vmul.f32 %v1049, %v1048
        %v1051 = vmul.f32 0.5, %v1050
        %v1052 = vsub.f32 1.5, %v1051
        %v1053 = vmul.f32 %v1048, %v1052
        %vm1054 = vweird.f32 %v936
        %vm1055 = vweird.f32 %v1048
        %vm1056 = vmor %vm1054, %vm1055
        %v1057 = vsel %vm1056, %v1048, %v1053
        %v1058 = vrsqrt.pop %v937
        %v1059 = vmul.f32 %v1058, %v937
        %v1060 = vmul.f32 %v1059, %v1058
        %v1061 = vmul.f32 0.5, %v1060
        %v1062 = vsub.f32 1.5, %v1061
        %v1063 = vmul.f32 %v1058, %v1062
        %vm1064 = vweird.f32 %v937
        %vm1065 = vweird.f32 %v1058
        %vm1066 = vmor %vm1064, %vm1065
        %v1067 = vsel %vm1066, %v1058, %v1063
        %v1068 = vrsqrt.pop %v938
        %v1069 = vmul.f32 %v1068, %v938
        %v1070 = vmul.f32 %v1069, %v1068
        %v1071 = vmul.f32 0.5, %v1070
        %v1072 = vsub.f32 1.5, %v1071
        %v1073 = vmul.f32 %v1068, %v1072
        %vm1074 = vweird.f32 %v938
        %vm1075 = vweird.f32 %v1068
        %vm1076 = vmor %vm1074, %vm1075
        %v1077 = vsel %vm1076, %v1068, %v1073
        %v1078 = vrsqrt.pop %v939
        %v1079 = vmul.f32 %v1078, %v939
        %v1080 = vmul.f32 %v1079, %v1078
        %v1081 = vmul.f32 0.5, %v1080
        %v1082 = vsub.f32 1.5, %v1081
        %v1083 = vmul.f32 %v1078, %v1082
        %vm1084 = vweird.f32 %v939
        %vm1085 = vweird.f32 %v1078
        %vm1086 = vmor %vm1084, %vm1085
        %v1087 = vsel %vm1086, %v1078, %v1083
        %v1088 = vrsqrt.pop %v940
        %v1089 = vmul.f32 %v1088, %v940
        %v1090 = vmul.f32 %v1089, %v1088
        %v1091 = vmul.f32 0.5, %v1090
        %v1092 = vsub.f32 1.5, %v1091
        %v1093 = vmul.f32 %v1088, %v1092
        %vm1094 = vweird.f32 %v940
        %vm1095 = vweird.f32 %v1088
        %vm1096 = vmor %vm1094, %vm1095
        %v1097 = vsel %vm1096, %v1088, %v1093
        %v1098 = vrsqrt.pop %v941
        %v1099 = vmul.f32 %v1098, %v941
        %v1100 = vmul.f32 %v1099, %v1098
        %v1101 = vmul.f32 0.5, %v1100
        %v1102 = vsub.f32 1.5, %v1101
        %v1103 = vmul.f32 %v1098, %v1102
        %vm1104 = vweird.f32 %v941
        %vm1105 = vweird.f32 %v1098
        %vm1106 = vmor %vm1104, %vm1105
        %v1107 = vsel %vm1106, %v1098, %v1103
        %v1108 = vrsqrt.pop %v942
        %v1109 = vmul.f32 %v1108, %v942
        %v1110 = vmul.f32 %v1109, %v1108
        %v1111 = vmul.f32 0.5, %v1110
        %v1112 = vsub.f32 1.5, %v1111
        %v1113 = vmul.f32 %v1108, %v1112
        %vm1114 = vweird.f32 %v942
        %vm1115 = vweird.f32 %v1108
        %vm1116 = vmor %vm1114, %vm1115
        %v1117 = vsel %vm1116, %v1108, %v1113
        %v1118 = vrsqrt.pop %v943
        %v1119 = vmul.f32 %v1118, %v943
        %v1120 = vmul.f32 %v1119, %v1118
        %v1121 = vmul.f32 0.5, %v1120
        %v1122 = vsub.f32 1.5, %v1121
        %v1123 = vmul.f32 %v1118, %v1122
        %vm1124 = vweird.f32 %v943
        %vm1125 = vweird.f32 %v1118
        %vm1126 = vmor %vm1124, %vm1125
        %v1127 = vsel %vm1126, %v1118, %v1123
        %v1128 = vrsqrt.pop %v944
        %v1129 = vmul.f32 %v1128, %v944
        %v1130 = vmul.f32 %v1129, %v1128
        %v1131 = vmul.f32 0.5, %v1130
        %v1132 = vsub.f32 1.5, %v1131
        %v1133 = vmul.f32 %v1128, %v1132
        %vm1134 = vweird.f32 %v944
        %vm1135 = vweird.f32 %v1128
        %vm1136 = vmor %vm1134, %vm1135
        %v1137 = vsel %vm1136, %v1128, %v1133
        %v1138 = vrsqrt.pop %v945
        %v1139 = vmul.f32 %v1138, %v945
        %v1140 = vmul.f32 %v1139, %v1138
        %v1141 = vmul.f32 0.5, %v1140
        %v1142 = vsub.f32 1.5, %v1141
        %v1143 = vmul.f32 %v1138, %v1142
        %vm1144 = vweird.f32 %v945
        %vm1145 = vweird.f32 %v1138
        %vm1146 = vmor %vm1144, %vm1145
        %v1147 = vsel %vm1146, %v1138, %v1143
        %v1148 = vrsqrt.pop %v946
        %v1149 = vmul.f32 %v1148, %v946
        %v1150 = vmul.f32 %v1149, %v1148
        %v1151 = vmul.f32 0.5, %v1150
        %v1152 = vsub.f32 1.5, %v1151
        %v1153 = vmul.f32 %v1148, %v1152
        %vm1154 = vweird.f32 %v946
        %vm1155 = vweird.f32 %v1148
        %vm1156 = vmor %vm1154, %vm1155
        %v1157 = vsel %vm1156, %v1148, %v1153
        %v1158 = vrsqrt.pop %v947
        %v1159 = vmul.f32 %v1158, %v947
        %v1160 = vmul.f32 %v1159, %v1158
        %v1161 = vmul.f32 0.5, %v1160
        %v1162 = vsub.f32 1.5, %v1161
        %v1163 = vmul.f32 %v1158, %v1162
        %vm1164 = vweird.f32 %v947
        %vm1165 = vweird.f32 %v1158
        %vm1166 = vmor %vm1164, %vm1165
        %v1167 = vsel %vm1166, %v1158, %v1163
        %v1168 = vld [vmem:[%s2] sm:$0xff]
        %v1169 = vld [vmem:[%s2 + $0x8] sm:$0xff]
        %v1170 = vld [vmem:[%s2 + $0x10] sm:$0xff]
        %v1171 = vld [vmem:[%s2 + $0x18] sm:$0xff]
        %v1172 = vld [vmem:[%s2 + $0x20] sm:$0xff]
        %v1173 = vld [vmem:[%s2 + $0x28] sm:$0xff]
        %v1174 = vld [vmem:[%s2 + $0x30] sm:$0xff]
        %v1175 = vld [vmem:[%s2 + $0x38] sm:$0xff]
        %v1176 = vld [vmem:[%s2 + $0x40] sm:$0xff]
        %v1177 = vld [vmem:[%s2 + $0x48] sm:$0xff]
        %v1178 = vld [vmem:[%s2 + $0x50] sm:$0xff]
        %v1179 = vld [vmem:[%s2 + $0x58] sm:$0xff]
        %v1180 = vld [vmem:[%s2 + $0x60] sm:$0xff]
        %v1181 = vld [vmem:[%s2 + $0x68] sm:$0xff]
        %v1182 = vld [vmem:[%s2 + $0x70] sm:$0xff]
        %v1183 = vld [vmem:[%s2 + $0x78] sm:$0xff]
        %v1184 = vld [vmem:[%s2 + $0x80] sm:$0xff]
        %v1185 = vld [vmem:[%s2 + $0x88] sm:$0xff]
        %v1186 = vld [vmem:[%s2 + $0x90] sm:$0xff]
        %v1187 = vld [vmem:[%s2 + $0x98] sm:$0xff]
        %v1188 = vld [vmem:[%s2 + $0xa0] sm:$0xff]
        %v1189 = vld [vmem:[%s2 + $0xa8] sm:$0xff]
        %v1190 = vmul.f32 %v1168, %v957
        %v1191 = vmul.f32 %v1169, %v967
        %v1192 = vmul.f32 %v1170, %v977
        %v1193 = vmul.f32 %v1171, %v987
        %v1194 = vmul.f32 %v1172, %v997
        %v1195 = vmul.f32 %v1173, %v1007
        %v1196 = vmul.f32 %v1174, %v1017
        %v1197 = vmul.f32 %v1175, %v1027
        %v1198 = vmul.f32 %v1176, %v1037
        %v1199 = vmul.f32 %v1177, %v1047
        %v1200 = vmul.f32 %v1178, %v1057
        %v1201 = vmul.f32 %v1179, %v1067
        %v1202 = vmul.f32 %v1180, %v1077
        %v1203 = vmul.f32 %v1181, %v1087
        %v1204 = vmul.f32 %v1182, %v1097
        %v1205 = vmul.f32 %v1183, %v1107
        %v1206 = vmul.f32 %v1184, %v1117
        %v1207 = vmul.f32 %v1185, %v1127
        %v1208 = vmul.f32 %v1186, %v1137
        %v1209 = vmul.f32 %v1187, %v1147
        %v1210 = vmul.f32 %v1188, %v1157
        %v1211 = vmul.f32 %v1189, %v1167
        %vm1212 = vcmask 7168
        %1213 = vst.msk [vmem:[#allocation4] sm:$0xff] %vm1212, %v1190
        %1214 = vst.msk [vmem:[#allocation4 + $0x8] sm:$0xff] %vm1212, %v1191
        %1215 = vst.msk [vmem:[#allocation4 + $0x10] sm:$0xff] %vm1212, %v1192
        %1216 = vst.msk [vmem:[#allocation4 + $0x18] sm:$0xff] %vm1212, %v1193
        %1217 = vst.msk [vmem:[#allocation4 + $0x20] sm:$0xff] %vm1212, %v1194
        %1218 = vst.msk [vmem:[#allocation4 + $0x28] sm:$0xff] %vm1212, %v1195
        %1219 = vst.msk [vmem:[#allocation4 + $0x30] sm:$0xff] %vm1212, %v1196
        %1220 = vst.msk [vmem:[#allocation4 + $0x38] sm:$0xff] %vm1212, %v1197
        %1221 = vst.msk [vmem:[#allocation4 + $0x40] sm:$0xff] %vm1212, %v1198
        %1222 = vst.msk [vmem:[#allocation4 + $0x48] sm:$0xff] %vm1212, %v1199
        %1223 = vst.msk [vmem:[#allocation4 + $0x50] sm:$0xff] %vm1212, %v1200
        %1224 = vst.msk [vmem:[#allocation4 + $0x58] sm:$0xff] %vm1212, %v1201
        %1225 = vst.msk [vmem:[#allocation4 + $0x60] sm:$0xff] %vm1212, %v1202
        %1226 = vst.msk [vmem:[#allocation4 + $0x68] sm:$0xff] %vm1212, %v1203
        %1227 = vst.msk [vmem:[#allocation4 + $0x70] sm:$0xff] %vm1212, %v1204
        %1228 = vst.msk [vmem:[#allocation4 + $0x78] sm:$0xff] %vm1212, %v1205
        %1229 = vst.msk [vmem:[#allocation4 + $0x80] sm:$0xff] %vm1212, %v1206
        %1230 = vst.msk [vmem:[#allocation4 + $0x88] sm:$0xff] %vm1212, %v1207
        %1231 = vst.msk [vmem:[#allocation4 + $0x90] sm:$0xff] %vm1212, %v1208
        %1232 = vst.msk [vmem:[#allocation4 + $0x98] sm:$0xff] %vm1212, %v1209
        %1233 = vst.msk [vmem:[#allocation4 + $0xa0] sm:$0xff] %vm1212, %v1210
        %1234 = vst.msk [vmem:[#allocation4 + $0xa8] sm:$0xff] %vm1212, %v1211
        %v1235 = vld [vmem:[%s3] sm:$0xff]
        %v1236 = vld [vmem:[%s3 + $0x8] sm:$0xff]
        %v1237 = vld [vmem:[%s3 + $0x10] sm:$0xff]
        %v1238 = vld [vmem:[%s3 + $0x18] sm:$0xff]
        %v1239 = vld [vmem:[%s3 + $0x20] sm:$0xff]
        %v1240 = vld [vmem:[%s3 + $0x28] sm:$0xff]
        %v1241 = vld [vmem:[%s3 + $0x30] sm:$0xff]
        %v1242 = vld [vmem:[%s3 + $0x38] sm:$0xff]
        %v1243 = vld [vmem:[%s3 + $0x40] sm:$0xff]
        %v1244 = vld [vmem:[%s3 + $0x48] sm:$0xff]
        %v1245 = vld [vmem:[%s3 + $0x50] sm:$0xff]
        %v1246 = vld [vmem:[%s3 + $0x58] sm:$0xff]
        %v1247 = vld [vmem:[%s3 + $0x60] sm:$0xff]
        %v1248 = vld [vmem:[%s3 + $0x68] sm:$0xff]
        %v1249 = vld [vmem:[%s3 + $0x70] sm:$0xff]
        %v1250 = vld [vmem:[%s3 + $0x78] sm:$0xff]
        %v1251 = vld [vmem:[%s3 + $0x80] sm:$0xff]
        %v1252 = vld [vmem:[%s3 + $0x88] sm:$0xff]
        %v1253 = vld [vmem:[%s3 + $0x90] sm:$0xff]
        %v1254 = vld [vmem:[%s3 + $0x98] sm:$0xff]
        %v1255 = vld [vmem:[%s3 + $0xa0] sm:$0xff]
        %v1256 = vld [vmem:[%s3 + $0xa8] sm:$0xff]
        %v1257 = vmul.f32 %v794, %v1190
        %v1258 = vmul.f32 %v795, %v1191
        %v1259 = vmul.f32 %v796, %v1192
        %v1260 = vmul.f32 %v797, %v1193
        %v1261 = vmul.f32 %v798, %v1194
        %v1262 = vmul.f32 %v799, %v1195
        %v1263 = vmul.f32 %v800, %v1196
        %v1264 = vmul.f32 %v801, %v1197
        %v1265 = vmul.f32 %v802, %v1198
        %v1266 = vmul.f32 %v803, %v1199
        %v1267 = vmul.f32 %v804, %v1200
        %v1268 = vmul.f32 %v805, %v1201
        %v1269 = vmul.f32 %v806, %v1202
        %v1270 = vmul.f32 %v807, %v1203
        %v1271 = vmul.f32 %v808, %v1204
        %v1272 = vmul.f32 %v809, %v1205
        %v1273 = vmul.f32 %v810, %v1206
        %v1274 = vmul.f32 %v811, %v1207
        %v1275 = vmul.f32 %v812, %v1208
        %v1276 = vmul.f32 %v813, %v1209
        %v1277 = vmul.f32 %v814, %v1210
        %v1278 = vmul.f32 %v815, %v1211
        %v1279 = vsub.f32 %v1235, %v1257
        %v1280 = vsub.f32 %v1236, %v1258
        %v1281 = vsub.f32 %v1237, %v1259
        %v1282 = vsub.f32 %v1238, %v1260
        %v1283 = vsub.f32 %v1239, %v1261
        %v1284 = vsub.f32 %v1240, %v1262
        %v1285 = vsub.f32 %v1241, %v1263
        %v1286 = vsub.f32 %v1242, %v1264
        %v1287 = vsub.f32 %v1243, %v1265
        %v1288 = vsub.f32 %v1244, %v1266
        %v1289 = vsub.f32 %v1245, %v1267
        %v1290 = vsub.f32 %v1246, %v1268
        %v1291 = vsub.f32 %v1247, %v1269
        %v1292 = vsub.f32 %v1248, %v1270
        %v1293 = vsub.f32 %v1249, %v1271
        %v1294 = vsub.f32 %v1250, %v1272
        %v1295 = vsub.f32 %v1251, %v1273
        %v1296 = vsub.f32 %v1252, %v1274
        %v1297 = vsub.f32 %v1253, %v1275
        %v1298 = vsub.f32 %v1254, %v1276
        %v1299 = vsub.f32 %v1255, %v1277
        %v1300 = vsub.f32 %v1256, %v1278
        %1301 = vst.msk [vmem:[#allocation5] sm:$0xff] %vm1212, %v1279
        %1302 = vst.msk [vmem:[#allocation5 + $0x8] sm:$0xff] %vm1212, %v1280
        %1303 = vst.msk [vmem:[#allocation5 + $0x10] sm:$0xff] %vm1212, %v1281
        %1304 = vst.msk [vmem:[#allocation5 + $0x18] sm:$0xff] %vm1212, %v1282
        %1305 = vst.msk [vmem:[#allocation5 + $0x20] sm:$0xff] %vm1212, %v1283
        %1306 = vst.msk [vmem:[#allocation5 + $0x28] sm:$0xff] %vm1212, %v1284
        %1307 = vst.msk [vmem:[#allocation5 + $0x30] sm:$0xff] %vm1212, %v1285
        %1308 = vst.msk [vmem:[#allocation5 + $0x38] sm:$0xff] %vm1212, %v1286
        %1309 = vst.msk [vmem:[#allocation5 + $0x40] sm:$0xff] %vm1212, %v1287
        %1310 = vst.msk [vmem:[#allocation5 + $0x48] sm:$0xff] %vm1212, %v1288
        %1311 = vst.msk [vmem:[#allocation5 + $0x50] sm:$0xff] %vm1212, %v1289
        %1312 = vst.msk [vmem:[#allocation5 + $0x58] sm:$0xff] %vm1212, %v1290
        %1313 = vst.msk [vmem:[#allocation5 + $0x60] sm:$0xff] %vm1212, %v1291
        %1314 = vst.msk [vmem:[#allocation5 + $0x68] sm:$0xff] %vm1212, %v1292
        %1315 = vst.msk [vmem:[#allocation5 + $0x70] sm:$0xff] %vm1212, %v1293
        %1316 = vst.msk [vmem:[#allocation5 + $0x78] sm:$0xff] %vm1212, %v1294
        %1317 = vst.msk [vmem:[#allocation5 + $0x80] sm:$0xff] %vm1212, %v1295
        %1318 = vst.msk [vmem:[#allocation5 + $0x88] sm:$0xff] %vm1212, %v1296
        %1319 = vst.msk [vmem:[#allocation5 + $0x90] sm:$0xff] %vm1212, %v1297
        %1320 = vst.msk [vmem:[#allocation5 + $0x98] sm:$0xff] %vm1212, %v1298
        %1321 = vst.msk [vmem:[#allocation5 + $0xa0] sm:$0xff] %vm1212, %v1299
        %1322 = vst.msk [vmem:[#allocation5 + $0xa8] sm:$0xff] %vm1212, %v1300
      $region48: #{tpu_custom_call.1} parent=35 // pred_fallthru
        _
      // Predicated region
      $region49: #{tpu_custom_call.1} parent=35 // pred_check
        %p1323 = pneg %p767
      $region50: #{tpu_custom_call.1} parent=35 // pred_check_branch
        %1325 = sbr.rel (%p1323) target = $region52
      $region51: #{tpu_custom_call.1} parent=35 // pred_region
        %v1326 = vld [vmem:[#allocation4] sm:$0xff]
        %v1327 = vld [vmem:[#allocation4 + $0x8] sm:$0xff]
        %v1328 = vld [vmem:[#allocation4 + $0x10] sm:$0xff]
        %v1329 = vld [vmem:[#allocation4 + $0x18] sm:$0xff]
        %v1330 = vld [vmem:[#allocation4 + $0x20] sm:$0xff]
        %v1331 = vld [vmem:[#allocation4 + $0x28] sm:$0xff]
        %v1332 = vld [vmem:[#allocation4 + $0x30] sm:$0xff]
        %v1333 = vld [vmem:[#allocation4 + $0x38] sm:$0xff]
        %v1334 = vld [vmem:[#allocation4 + $0x40] sm:$0xff]
        %v1335 = vld [vmem:[#allocation4 + $0x48] sm:$0xff]
        %v1336 = vld [vmem:[#allocation4 + $0x50] sm:$0xff]
        %v1337 = vld [vmem:[#allocation4 + $0x58] sm:$0xff]
        %v1338 = vld [vmem:[#allocation4 + $0x60] sm:$0xff]
        %v1339 = vld [vmem:[#allocation4 + $0x68] sm:$0xff]
        %v1340 = vld [vmem:[#allocation4 + $0x70] sm:$0xff]
        %v1341 = vld [vmem:[#allocation4 + $0x78] sm:$0xff]
        %v1342 = vld [vmem:[#allocation4 + $0x80] sm:$0xff]
        %v1343 = vld [vmem:[#allocation4 + $0x88] sm:$0xff]
        %v1344 = vld [vmem:[#allocation4 + $0x90] sm:$0xff]
        %v1345 = vld [vmem:[#allocation4 + $0x98] sm:$0xff]
        %v1346 = vld [vmem:[#allocation4 + $0xa0] sm:$0xff]
        %v1347 = vld [vmem:[#allocation4 + $0xa8] sm:$0xff]
        %1349 = vset.pattern.permute.xlu0 0
        %1350 = vperm.xlu0 %1349, %v1326
        %v1351 = vpop.permute.xlu0 %1350
        %1354 = vset.pattern.permute.xlu0 0
        %1355 = vperm.xlu0 %1354, %v1327
        %v1356 = vpop.permute.xlu0 %1355
        %1359 = vset.pattern.permute.xlu0 0
        %1360 = vperm.xlu0 %1359, %v1328
        %v1361 = vpop.permute.xlu0 %1360
        %1364 = vset.pattern.permute.xlu0 0
        %1365 = vperm.xlu0 %1364, %v1329
        %v1366 = vpop.permute.xlu0 %1365
        %1369 = vset.pattern.permute.xlu0 0
        %1370 = vperm.xlu0 %1369, %v1330
        %v1371 = vpop.permute.xlu0 %1370
        %1374 = vset.pattern.permute.xlu0 0
        %1375 = vperm.xlu0 %1374, %v1331
        %v1376 = vpop.permute.xlu0 %1375
        %1379 = vset.pattern.permute.xlu0 0
        %1380 = vperm.xlu0 %1379, %v1332
        %v1381 = vpop.permute.xlu0 %1380
        %1384 = vset.pattern.permute.xlu0 0
        %1385 = vperm.xlu0 %1384, %v1333
        %v1386 = vpop.permute.xlu0 %1385
        %1389 = vset.pattern.permute.xlu0 0
        %1390 = vperm.xlu0 %1389, %v1334
        %v1391 = vpop.permute.xlu0 %1390
        %1394 = vset.pattern.permute.xlu0 0
        %1395 = vperm.xlu0 %1394, %v1335
        %v1396 = vpop.permute.xlu0 %1395
        %1399 = vset.pattern.permute.xlu0 0
        %1400 = vperm.xlu0 %1399, %v1336
        %v1401 = vpop.permute.xlu0 %1400
        %1404 = vset.pattern.permute.xlu0 0
        %1405 = vperm.xlu0 %1404, %v1337
        %v1406 = vpop.permute.xlu0 %1405
        %1409 = vset.pattern.permute.xlu0 0
        %1410 = vperm.xlu0 %1409, %v1338
        %v1411 = vpop.permute.xlu0 %1410
        %1414 = vset.pattern.permute.xlu0 0
        %1415 = vperm.xlu0 %1414, %v1339
        %v1416 = vpop.permute.xlu0 %1415
        %1419 = vset.pattern.permute.xlu0 0
        %1420 = vperm.xlu0 %1419, %v1340
        %v1421 = vpop.permute.xlu0 %1420
        %1424 = vset.pattern.permute.xlu0 0
        %1425 = vperm.xlu0 %1424, %v1341
        %v1426 = vpop.permute.xlu0 %1425
        %1429 = vset.pattern.permute.xlu0 0
        %1430 = vperm.xlu0 %1429, %v1342
        %v1431 = vpop.permute.xlu0 %1430
        %1434 = vset.pattern.permute.xlu0 0
        %1435 = vperm.xlu0 %1434, %v1343
        %v1436 = vpop.permute.xlu0 %1435
        %1439 = vset.pattern.permute.xlu0 0
        %1440 = vperm.xlu0 %1439, %v1344
        %v1441 = vpop.permute.xlu0 %1440
        %1444 = vset.pattern.permute.xlu0 0
        %1445 = vperm.xlu0 %1444, %v1345
        %v1446 = vpop.permute.xlu0 %1445
        %1449 = vset.pattern.permute.xlu0 0
        %1450 = vperm.xlu0 %1449, %v1346
        %v1451 = vpop.permute.xlu0 %1450
        %1454 = vset.pattern.permute.xlu0 0
        %1455 = vperm.xlu0 %1454, %v1347
        %v1456 = vpop.permute.xlu0 %1455
        %v1458 = vmul.f32 %v361, %v1351
        %v1459 = vmul.f32 %v364, %v1356
        %v1460 = vmul.f32 %v367, %v1361
        %v1461 = vmul.f32 %v370, %v1366
        %v1462 = vmul.f32 %v373, %v1371
        %v1463 = vmul.f32 %v376, %v1376
        %v1464 = vmul.f32 %v379, %v1381
        %v1465 = vmul.f32 %v382, %v1386
        %v1466 = vmul.f32 %v385, %v1391
        %v1467 = vmul.f32 %v388, %v1396
        %v1468 = vmul.f32 %v391, %v1401
        %v1469 = vmul.f32 %v394, %v1406
        %v1470 = vmul.f32 %v397, %v1411
        %v1471 = vmul.f32 %v400, %v1416
        %v1472 = vmul.f32 %v403, %v1421
        %v1473 = vmul.f32 %v406, %v1426
        %v1474 = vmul.f32 %v409, %v1431
        %v1475 = vmul.f32 %v412, %v1436
        %v1476 = vmul.f32 %v415, %v1441
        %v1477 = vmul.f32 %v418, %v1446
        %v1478 = vmul.f32 %v421, %v1451
        %v1479 = vmul.f32 %v424, %v1456
        %v1480 = vld [vmem:[#allocation5] sm:$0xff]
        %v1481 = vld [vmem:[#allocation5 + $0x8] sm:$0xff]
        %v1482 = vld [vmem:[#allocation5 + $0x10] sm:$0xff]
        %v1483 = vld [vmem:[#allocation5 + $0x18] sm:$0xff]
        %v1484 = vld [vmem:[#allocation5 + $0x20] sm:$0xff]
        %v1485 = vld [vmem:[#allocation5 + $0x28] sm:$0xff]
        %v1486 = vld [vmem:[#allocation5 + $0x30] sm:$0xff]
        %v1487 = vld [vmem:[#allocation5 + $0x38] sm:$0xff]
        %v1488 = vld [vmem:[#allocation5 + $0x40] sm:$0xff]
        %v1489 = vld [vmem:[#allocation5 + $0x48] sm:$0xff]
        %v1490 = vld [vmem:[#allocation5 + $0x50] sm:$0xff]
        %v1491 = vld [vmem:[#allocation5 + $0x58] sm:$0xff]
        %v1492 = vld [vmem:[#allocation5 + $0x60] sm:$0xff]
        %v1493 = vld [vmem:[#allocation5 + $0x68] sm:$0xff]
        %v1494 = vld [vmem:[#allocation5 + $0x70] sm:$0xff]
        %v1495 = vld [vmem:[#allocation5 + $0x78] sm:$0xff]
        %v1496 = vld [vmem:[#allocation5 + $0x80] sm:$0xff]
        %v1497 = vld [vmem:[#allocation5 + $0x88] sm:$0xff]
        %v1498 = vld [vmem:[#allocation5 + $0x90] sm:$0xff]
        %v1499 = vld [vmem:[#allocation5 + $0x98] sm:$0xff]
        %v1500 = vld [vmem:[#allocation5 + $0xa0] sm:$0xff]
        %v1501 = vld [vmem:[#allocation5 + $0xa8] sm:$0xff]
        %1503 = vset.pattern.permute.xlu0 0
        %1504 = vperm.xlu0 %1503, %v1480
        %v1505 = vpop.permute.xlu0 %1504
        %1508 = vset.pattern.permute.xlu0 0
        %1509 = vperm.xlu0 %1508, %v1481
        %v1510 = vpop.permute.xlu0 %1509
        %1513 = vset.pattern.permute.xlu0 0
        %1514 = vperm.xlu0 %1513, %v1482
        %v1515 = vpop.permute.xlu0 %1514
        %1518 = vset.pattern.permute.xlu0 0
        %1519 = vperm.xlu0 %1518, %v1483
        %v1520 = vpop.permute.xlu0 %1519
        %1523 = vset.pattern.permute.xlu0 0
        %1524 = vperm.xlu0 %1523, %v1484
        %v1525 = vpop.permute.xlu0 %1524
        %1528 = vset.pattern.permute.xlu0 0
        %1529 = vperm.xlu0 %1528, %v1485
        %v1530 = vpop.permute.xlu0 %1529
        %1533 = vset.pattern.permute.xlu0 0
        %1534 = vperm.xlu0 %1533, %v1486
        %v1535 = vpop.permute.xlu0 %1534
        %1538 = vset.pattern.permute.xlu0 0
        %1539 = vperm.xlu0 %1538, %v1487
        %v1540 = vpop.permute.xlu0 %1539
        %1543 = vset.pattern.permute.xlu0 0
        %1544 = vperm.xlu0 %1543, %v1488
        %v1545 = vpop.permute.xlu0 %1544
        %1548 = vset.pattern.permute.xlu0 0
        %1549 = vperm.xlu0 %1548, %v1489
        %v1550 = vpop.permute.xlu0 %1549
        %1553 = vset.pattern.permute.xlu0 0
        %1554 = vperm.xlu0 %1553, %v1490
        %v1555 = vpop.permute.xlu0 %1554
        %1558 = vset.pattern.permute.xlu0 0
        %1559 = vperm.xlu0 %1558, %v1491
        %v1560 = vpop.permute.xlu0 %1559
        %1563 = vset.pattern.permute.xlu0 0
        %1564 = vperm.xlu0 %1563, %v1492
        %v1565 = vpop.permute.xlu0 %1564
        %1568 = vset.pattern.permute.xlu0 0
        %1569 = vperm.xlu0 %1568, %v1493
        %v1570 = vpop.permute.xlu0 %1569
        %1573 = vset.pattern.permute.xlu0 0
        %1574 = vperm.xlu0 %1573, %v1494
        %v1575 = vpop.permute.xlu0 %1574
        %1578 = vset.pattern.permute.xlu0 0
        %1579 = vperm.xlu0 %1578, %v1495
        %v1580 = vpop.permute.xlu0 %1579
        %1583 = vset.pattern.permute.xlu0 0
        %1584 = vperm.xlu0 %1583, %v1496
        %v1585 = vpop.permute.xlu0 %1584
        %1588 = vset.pattern.permute.xlu0 0
        %1589 = vperm.xlu0 %1588, %v1497
        %v1590 = vpop.permute.xlu0 %1589
        %1593 = vset.pattern.permute.xlu0 0
        %1594 = vperm.xlu0 %1593, %v1498
        %v1595 = vpop.permute.xlu0 %1594
        %1598 = vset.pattern.permute.xlu0 0
        %1599 = vperm.xlu0 %1598, %v1499
        %v1600 = vpop.permute.xlu0 %1599
        %1603 = vset.pattern.permute.xlu0 0
        %1604 = vperm.xlu0 %1603, %v1500
        %v1605 = vpop.permute.xlu0 %1604
        %1608 = vset.pattern.permute.xlu0 0
        %1609 = vperm.xlu0 %1608, %v1501
        %v1610 = vpop.permute.xlu0 %1609
        %v1612 = vadd.f32 %v1458, %v1505
        %v1613 = vadd.f32 %v1459, %v1510
        %v1614 = vadd.f32 %v1460, %v1515
        %v1615 = vadd.f32 %v1461, %v1520
        %v1616 = vadd.f32 %v1462, %v1525
        %v1617 = vadd.f32 %v1463, %v1530
        %v1618 = vadd.f32 %v1464, %v1535
        %v1619 = vadd.f32 %v1465, %v1540
        %v1620 = vadd.f32 %v1466, %v1545
        %v1621 = vadd.f32 %v1467, %v1550
        %v1622 = vadd.f32 %v1468, %v1555
        %v1623 = vadd.f32 %v1469, %v1560
        %v1624 = vadd.f32 %v1470, %v1565
        %v1625 = vadd.f32 %v1471, %v1570
        %v1626 = vadd.f32 %v1472, %v1575
        %v1627 = vadd.f32 %v1473, %v1580
        %v1628 = vadd.f32 %v1474, %v1585
        %v1629 = vadd.f32 %v1475, %v1590
        %v1630 = vadd.f32 %v1476, %v1595
        %v1631 = vadd.f32 %v1477, %v1600
        %v1632 = vadd.f32 %v1478, %v1605
        %v1633 = vadd.f32 %v1479, %v1610
        %v1634 = vmax.f32 %v1612, 0.0
        %v1635 = vmax.f32 %v1613, 0.0
        %v1636 = vmax.f32 %v1614, 0.0
        %v1637 = vmax.f32 %v1615, 0.0
        %v1638 = vmax.f32 %v1616, 0.0
        %v1639 = vmax.f32 %v1617, 0.0
        %v1640 = vmax.f32 %v1618, 0.0
        %v1641 = vmax.f32 %v1619, 0.0
        %v1642 = vmax.f32 %v1620, 0.0
        %v1643 = vmax.f32 %v1621, 0.0
        %v1644 = vmax.f32 %v1622, 0.0
        %v1645 = vmax.f32 %v1623, 0.0
        %v1646 = vmax.f32 %v1624, 0.0
        %v1647 = vmax.f32 %v1625, 0.0
        %v1648 = vmax.f32 %v1626, 0.0
        %v1649 = vmax.f32 %v1627, 0.0
        %v1650 = vmax.f32 %v1628, 0.0
        %v1651 = vmax.f32 %v1629, 0.0
        %v1652 = vmax.f32 %v1630, 0.0
        %v1653 = vmax.f32 %v1631, 0.0
        %v1654 = vmax.f32 %v1632, 0.0
        %v1655 = vmax.f32 %v1633, 0.0
        %vm1656 = vcmask 523264
        %1657 = vst.msk [vmem:[%s243] sm:$0xff] %vm1656, %v1634
        %1658 = vst.msk [vmem:[%s243 + $0x8] sm:$0xff] %vm1656, %v1635
        %1659 = vst.msk [vmem:[%s243 + $0x10] sm:$0xff] %vm1656, %v1636
        %1660 = vst.msk [vmem:[%s243 + $0x18] sm:$0xff] %vm1656, %v1637
        %1661 = vst.msk [vmem:[%s243 + $0x20] sm:$0xff] %vm1656, %v1638
        %1662 = vst.msk [vmem:[%s243 + $0x28] sm:$0xff] %vm1656, %v1639
        %1663 = vst.msk [vmem:[%s243 + $0x30] sm:$0xff] %vm1656, %v1640
        %1664 = vst.msk [vmem:[%s243 + $0x38] sm:$0xff] %vm1656, %v1641
        %1665 = vst.msk [vmem:[%s243 + $0x40] sm:$0xff] %vm1656, %v1642
        %1666 = vst.msk [vmem:[%s243 + $0x48] sm:$0xff] %vm1656, %v1643
        %1667 = vst.msk [vmem:[%s243 + $0x50] sm:$0xff] %vm1656, %v1644
        %1668 = vst.msk [vmem:[%s243 + $0x58] sm:$0xff] %vm1656, %v1645
        %1669 = vst.msk [vmem:[%s243 + $0x60] sm:$0xff] %vm1656, %v1646
        %1670 = vst.msk [vmem:[%s243 + $0x68] sm:$0xff] %vm1656, %v1647
        %1671 = vst.msk [vmem:[%s243 + $0x70] sm:$0xff] %vm1656, %v1648
        %1672 = vst.msk [vmem:[%s243 + $0x78] sm:$0xff] %vm1656, %v1649
        %1673 = vst.msk [vmem:[%s243 + $0x80] sm:$0xff] %vm1656, %v1650
        %1674 = vst.msk [vmem:[%s243 + $0x88] sm:$0xff] %vm1656, %v1651
        %1675 = vst.msk [vmem:[%s243 + $0x90] sm:$0xff] %vm1656, %v1652
        %1676 = vst.msk [vmem:[%s243 + $0x98] sm:$0xff] %vm1656, %v1653
        %1677 = vst.msk [vmem:[%s243 + $0xa0] sm:$0xff] %vm1656, %v1654
        %1678 = vst.msk [vmem:[%s243 + $0xa8] sm:$0xff] %vm1656, %v1655
      $region52: #{tpu_custom_call.1} parent=35 // pred_fallthru
        _
      %s1679 = smul.u32 %s21, %s20
      %s1680 = smul.u32 %s22, %s20
      %p1681 = scmp.lt.s32.totalorder %s1679, 1
      %s1682 = scalar_select %p1681, %s1679, 1
      %p1683 = scmp.lt.s32.totalorder %s1680, 0
      %s1684 = scalar_select %p1683, %s1680, 0
      %s1685 = smul.addr %s1682, 22
      %s1686 = sadd.s32 %s1684, %s1685
      %s1687 = smul.addr %s1686, 8
      %s1688 = scalar_lea.vmem %s4, %s1687
      // Predicated region
      $region53: #{tpu_custom_call.1} parent=35 // pred_check
        %p1689 = pneg %p149
      $region54: #{tpu_custom_call.1} parent=35 // pred_check_branch
        %1691 = sbr.rel (%p1689) target = $region56
      $region55: #{tpu_custom_call.1} parent=35 // pred_region
        %s1692 = smul.u32 %s21, %s20
        %s1693 = smul.u32 %s22, %s20
      $region56: #{tpu_custom_call.1} parent=35 // pred_fallthru
        _
    $region36: #{tpu_custom_call.1} parent=5 // pred_fallthru
      _
    %p1694 = scmp.le.s32.totalorder 2, %s10
    // Predicated region
    $region57: #{tpu_custom_call.1} parent=5 // pred_check
      %p1695 = pneg %p1694
    $region58: #{tpu_custom_call.1} parent=5 // pred_check_branch
      %1697 = sbr.rel (%p1695) target = $region60
    $region59: #{tpu_custom_call.1} parent=5 // pred_region
      %s1698 = ssub.s32 %s10, 2
      // Predicated region
      $region61: #{tpu_custom_call.1} parent=59 // pred_check
        %p1699 = pneg %p155
      $region62: #{tpu_custom_call.1} parent=59 // pred_check_branch
        %1701 = sbr.rel (%p1699) target = $region64
      $region63: #{tpu_custom_call.1} parent=59 // pred_region
        %s1702 = smul.u32 %s24, %s23
        %s1703 = smul.u32 %s25, %s23
        %p1704 = scmp.lt.s32.totalorder %s1702, 1
        %s1705 = scalar_select %p1704, %s1702, 1
        %p1706 = scmp.lt.s32.totalorder %s1703, 0
        %s1707 = scalar_select %p1706, %s1703, 0
        %s1708 = smul.addr %s1705, 22
        %s1709 = sadd.s32 %s1707, %s1708
        %s1710 = smul.addr %s1709, 8
        %s1711 = scalar_lea.vmem %s4, %s1710
      $region64: #{tpu_custom_call.1} parent=59 // pred_fallthru
        _
    $region60: #{tpu_custom_call.1} parent=5 // pred_fallthru
      _
  $region6: #{tpu_custom_call.1} parent=0 // loop_footer
    %s14 = sadd.s32 1, %s10
  $region7: #{tpu_custom_call.1} parent=0 // loop_footer_branch
    %9 = sbr.rel target = $region3
  $region8: #{tpu_custom_call.1} parent=0 // loop_exit
    _

</llo_original>
